<compile_context>
chip_gen: v5e
topology: v5e:2x2
jax: 0.10.0
libtpu: 0.0.40
codegen_flags: <defaults>
</compile_context>

<pallas_src>
import functools

import jax
import jax.numpy as jnp
from jax.experimental import pallas as pl
from jax.experimental.pallas import tpu as pltpu

V_THRESHOLD = 1.0


# ---------------------------------------------------------------------------
# Kernels: one (or T small) MXU matmul(s) + unrolled LIF scan, dense stores.
# ---------------------------------------------------------------------------
def _make_conv1_kernel(T, inv_tau):
    """conv1: the frame is repeated over T, so the current is computed ONCE.
    Spikes for all T timesteps are written with a single dense (T*C, tm) store."""
    def kernel(x_ref, w_ref, b_ref, out_ref):
        cur = jnp.dot(w_ref[...], x_ref[...],
                      preferred_element_type=jnp.float32) + b_ref[...]
        v = jnp.zeros_like(cur)
        spikes = []
        for _ in range(T):                       # T small & static -> unrolled VPU loop
            v = v + (cur - v) * inv_tau
            s = (v >= V_THRESHOLD).astype(jnp.float32)
            spikes.append(s)
            v = v * (1.0 - s)                    # hard reset to 0
        # ONE dense store (rows ordered (t, c)) instead of T masked partial stores.
        out_ref[...] = jnp.concatenate(spikes, axis=0).astype(out_ref.dtype)
    return kernel


def _make_conv2_kernel(T, inv_tau):
    """conv2: per-timestep spike inputs [T, K, tm]; one small matmul per t on the
    resident weights, register-resident membrane, single dense (T*C, tm) store."""
    def kernel(x_ref, w_ref, b_ref, out_ref):
        w = w_ref[...]
        b = b_ref[...]
        v = None
        spikes = []
        for t in range(T):
            cur = jnp.dot(w, x_ref[t], preferred_element_type=jnp.float32) + b
            v = jnp.zeros_like(cur) if v is None else v
            v = v + (cur - v) * inv_tau
            s = (v >= V_THRESHOLD).astype(jnp.float32)
            spikes.append(s)
            v = v * (1.0 - s)
        out_ref[...] = jnp.concatenate(spikes, axis=0).astype(out_ref.dtype)
    return kernel


def _make_fc_kernel(T, inv_tau):
    """classifier: W[O, D] @ X[D, tb] per timestep (batch on the lane axis), LIF,
    rate readout (mean over T) folded in -> single dense [O, tb] store."""
    def kernel(x_ref, w_ref, b_ref, out_ref):
        w = w_ref[...]
        b = b_ref[...]
        v = None
        rate = None
        for t in range(T):
            cur = jnp.dot(w, x_ref[t], preferred_element_type=jnp.float32) + b
            if v is None:
                v = jnp.zeros_like(cur)
                rate = jnp.zeros_like(cur)
            v = v + (cur - v) * inv_tau
            s = (v >= V_THRESHOLD).astype(jnp.float32)
            rate = rate + s
            v = v * (1.0 - s)
        out_ref[...] = rate * (1.0 / T)
    return kernel


# ---------------------------------------------------------------------------
# pallas_call wrappers
# ---------------------------------------------------------------------------
def _pick_block_m(m, target=512):
    """Lane-tile size along M.  Single block when M is small (grid-step overhead
    exceeds per-block work, and it avoids odd block counts on v7x megacore);
    otherwise the largest 128-multiple divisor <= target, preferring an even
    block count.  target stays moderate: the unrolled LIF holds cur + v + the
    T spike tiles live, so vregs (not VMEM) are the constraint."""
    if m <= 1280:
        return m
    best_even = best_any = None
    d = 128
    while d <= min(m, target):
        if m % d == 0:
            best_any = d
            if (m // d) % 2 == 0:
                best_even = d
        d += 128
    return best_even or best_any or m


def conv1_lif(patches_km, w_ck, b_c, *, T, tau):
    """patches: [K, M] (time-invariant input).  Returns spikes [T*C, M] bf16,
    rows ordered (t, c), columns ordered (b, oh, ow)."""
    K, M = patches_km.shape
    C = w_ck.shape[0]
    tm = _pick_block_m(M)
    kernel = _make_conv1_kernel(T, 1.0 / tau)
    return pl.pallas_call(
        kernel,
        out_shape=jax.ShapeDtypeStruct((T * C, M), jnp.bfloat16),
        grid=(M // tm,),
        in_specs=[
            pl.BlockSpec((K, tm), lambda i: (0, i)),
            pl.BlockSpec((C, K), lambda i: (0, 0)),   # weights stay resident
            pl.BlockSpec((C, 1), lambda i: (0, 0)),
        ],
        out_specs=pl.BlockSpec((T * C, tm), lambda i: (0, i)),
        compiler_params=pltpu.CompilerParams(
            dimension_semantics=("parallel",)),        # independent M blocks
    )(patches_km.astype(jnp.bfloat16), w_ck.astype(jnp.bfloat16),
      b_c.reshape(C, 1).astype(jnp.float32))


def conv2_lif(patches_tkm, w_ck, b_c, *, T, tau):
    """patches: [T, K, M] spike-train im2col.  Returns spikes [T*C, M] bf16."""
    _, K, M = patches_tkm.shape
    C = w_ck.shape[0]
    tm = _pick_block_m(M)
    kernel = _make_conv2_kernel(T, 1.0 / tau)
    return pl.pallas_call(
        kernel,
        out_shape=jax.ShapeDtypeStruct((T * C, M), jnp.bfloat16),
        grid=(M // tm,),
        in_specs=[
            pl.BlockSpec((T, K, tm), lambda i: (0, 0, i)),
            pl.BlockSpec((C, K), lambda i: (0, 0)),
            pl.BlockSpec((C, 1), lambda i: (0, 0)),
        ],
        out_specs=pl.BlockSpec((T * C, tm), lambda i: (0, i)),
        compiler_params=pltpu.CompilerParams(
            dimension_semantics=("parallel",)),
    )(patches_tkm.astype(jnp.bfloat16), w_ck.astype(jnp.bfloat16),
      b_c.reshape(C, 1).astype(jnp.float32))


def fc_rate_readout(x_tdb, w_od, b_o, *, T, tau):
    """x: [T, D, B] (batch on lanes).  Returns the rate readout [O, B] f32
    (mean over T of the classifier LIF spikes)."""
    _, D, B = x_tdb.shape
    O = w_od.shape[0]
    tb = _pick_block_m(B)
    kernel = _make_fc_kernel(T, 1.0 / tau)
    return pl.pallas_call(
        kernel,
        out_shape=jax.ShapeDtypeStruct((O, B), jnp.float32),
        grid=(B // tb,),
        in_specs=[
            pl.BlockSpec((T, D, tb), lambda i: (0, 0, i)),
            pl.BlockSpec((O, D), lambda i: (0, 0)),
            pl.BlockSpec((O, 1), lambda i: (0, 0)),
        ],
        out_specs=pl.BlockSpec((O, tb), lambda i: (0, i)),
        compiler_params=pltpu.CompilerParams(
            dimension_semantics=("parallel",)),
    )(x_tdb.astype(jnp.bfloat16), w_od.astype(jnp.bfloat16),
      b_o.reshape(O, 1).astype(jnp.float32))


# ---------------------------------------------------------------------------
# JAX glue: im2col (transposed), maxpool, parameter init, forward.
# ---------------------------------------------------------------------------
def _im2col_km(x_bchw, k):
    """[B,C,H,W] -> [C*k*k, B*Ho*Wo]  (K ordered (c,kh,kw); M ordered (b,oh,ow))."""
    B, C, H, W = x_bchw.shape
    Ho, Wo = H - k + 1, W - k + 1
    cols = [x_bchw[:, :, di:di + Ho, dj:dj + Wo]
            for di in range(k) for dj in range(k)]
    p = jnp.stack(cols, axis=2)             # [B, C, k*k, Ho, Wo]
    p = p.transpose(1, 2, 0, 3, 4)          # [C, k*k, B, Ho, Wo]
    return p.reshape(C * k * k, B * Ho * Wo), (Ho, Wo)


def _im2col_tkm(s_tcbhw, k):
    """[T,C,B,H,W] -> [T, C*k*k, B*Ho*Wo]  (K ordered (c,kh,kw); M ordered (b,oh,ow))."""
    T, C, B, H, W = s_tcbhw.shape
    Ho, Wo = H - k + 1, W - k + 1
    cols = [s_tcbhw[:, :, :, di:di + Ho, dj:dj + Wo]
            for di in range(k) for dj in range(k)]
    p = jnp.stack(cols, axis=2)             # [T, C, k*k, B, Ho, Wo]
    return p.reshape(T, C * k * k, B * Ho * Wo), (Ho, Wo)


def _maxpool2x2(x_tcbhw):
    T, C, B, H, W = x_tcbhw.shape
    return x_tcbhw.reshape(T, C, B, H // 2, 2, W // 2, 2).max(axis=(4, 6))


def init_params(key, channels):
    """Deterministic init matching the PyTorch layer shapes (uniform +-1/sqrt(fan_in))."""
    def uconv(k, cout, cin, ks):
        bound = 1.0 / jnp.sqrt(cin * ks * ks)
        kw, kb = jax.random.split(k)
        return (jax.random.uniform(kw, (cout, cin, ks, ks), jnp.float32, -bound, bound),
                jax.random.uniform(kb, (cout,), jnp.float32, -bound, bound))

    def ulin(k, cout, cin):
        bound = 1.0 / jnp.sqrt(cin)
        kw, kb = jax.random.split(k)
        return (jax.random.uniform(kw, (cout, cin), jnp.float32, -bound, bound),
                jax.random.uniform(kb, (cout,), jnp.float32, -bound, bound))

    k1, k2, k3 = jax.random.split(key, 3)
    w1, b1 = uconv(k1, channels, 1, 5)                 # conv_1: 1 -> C, 5x5
    w2, b2 = uconv(k2, channels * 2, channels, 5)      # conv_2: C -> 2C, 5x5
    flat = channels * 2 * 4 * 4                        # 2C * 4 * 4 after two pools
    wc, bc = ulin(k3, 10, flat)                        # classifier: flat -> 10
    return dict(w1=w1, b1=b1, w2=w2, b2=b2, wc=wc, bc=bc)


def axon_sddtp_csnn_forward(x_b1hw, labels_b10, params, *, T, tau):
    """Eval-mode forward: returns (rate_output [B,10], mse_loss scalar)."""
    B = x_b1hw.shape[0]
    C1 = params["w1"].shape[0]
    C2 = params["w2"].shape[0]

    # --- Conv2dBlock 1: conv(5x5 valid) -> LIF -> maxpool(2).  The frame is
    # identical at every timestep, so the current is computed once in-kernel.
    p1, (oh1, ow1) = _im2col_km(x_b1hw, 5)                        # [25, B*24*24]
    s1 = conv1_lif(p1, params["w1"].reshape(C1, -1), params["b1"],
                   T=T, tau=tau)                                  # [T*C1, B*576]
    s1 = _maxpool2x2(s1.reshape(T, C1, B, oh1, ow1))              # [T, C1, B, 12, 12]

    # --- Conv2dBlock 2: conv(5x5 valid) -> LIF -> maxpool(2) on the spike train.
    p2, (oh2, ow2) = _im2col_tkm(s1, 5)                           # [T, C1*25, B*64]
    s2 = conv2_lif(p2, params["w2"].reshape(C2, -1), params["b2"],
                   T=T, tau=tau)                                  # [T*C2, B*64]
    s2 = _maxpool2x2(s2.reshape(T, C2, B, oh2, ow2))              # [T, C2, B, 4, 4]

    # --- FCBlock classifier + rate readout (mean over T fused into the kernel).
    D = C2 * s2.shape[3] * s2.shape[4]
    x3 = s2.transpose(0, 1, 3, 4, 2).reshape(T, D, B)             # D ordered (c,h,w)
    rate = fc_rate_readout(x3, params["wc"], params["bc"], T=T, tau=tau)  # [10, B]

    out = rate.T                                                  # [B, 10]
    loss = jnp.mean((out - labels_b10) ** 2)                      # F.mse_loss
    return out, loss


# ---------------------------------------------------------------------------
if __name__ == "__main__":
    T = 4
    channels = 4
    tau = 2.0
    axon_tau = 2.0  # TODO(synk): axon trace dynamics unused (block source unavailable)
    B = 2

    key = jax.random.PRNGKey(0)
    k_in, k_lab, k_par = jax.random.split(key, 3)

    # Module hard-codes 28x28 single-channel inputs (FMNIST).
    x = jax.random.uniform(k_in, (B, 1, 28, 28), jnp.float32)
    labels = jax.nn.one_hot(jax.random.randint(k_lab, (B,), 0, 10), 10,
                            dtype=jnp.float32)
    params = init_params(k_par, channels)

    fwd = jax.jit(functools.partial(axon_sddtp_csnn_forward, T=T, tau=tau))
    out, loss = fwd(x, labels, params)
    out = jax.block_until_ready(out)
    loss = jax.block_until_ready(loss)

    assert out.shape == (B, 10), out.shape
    assert loss.shape == (), loss.shape
    assert bool(jnp.all(jnp.isfinite(out))) and bool(jnp.isfinite(loss))
    assert bool(jnp.all((out >= 0.0) & (out <= 1.0)))   # rate of {0,1} spikes
    print("KERNEL_OK")
</pallas_src>

<mosaic_0001>
module attributes {stable_mosaic.version = 11 : i64} {
  func.func @kernel(%arg0: i32, %arg1: memref<25x1152xbf16, #tpu.memory_space<vmem>>, %arg2: memref<4x25xbf16, #tpu.memory_space<vmem>>, %arg3: memref<4x1xf32, #tpu.memory_space<vmem>>, %arg4: memref<16x1152xbf16, #tpu.memory_space<vmem>>) attributes {dimension_semantics = [#tpu.dimension_semantics<parallel>], iteration_bounds = array<i64: 1>, scalar_prefetch = 0 : i64, scratch_operands = 0 : i64, tpu.core_type = #tpu.core_type<tc>, window_params = [{transform_indices = @transform_0, window_bounds = array<i64: 25, 1152>}, {pipeline_mode = #tpu.pipeline_mode<synchronous>, transform_indices = @transform_1, window_bounds = array<i64: 4, 25>}, {pipeline_mode = #tpu.pipeline_mode<synchronous>, transform_indices = @transform_2, window_bounds = array<i64: 4, 1>}, {transform_indices = @transform_3, window_bounds = array<i64: 16, 1152>}]} {
    %c0 = arith.constant 0 : index
    %c0_0 = arith.constant 0 : index
    %0 = vector.load %arg2[%c0, %c0_0] : memref<4x25xbf16, #tpu.memory_space<vmem>>, vector<4x25xbf16>
    %c0_1 = arith.constant 0 : index
    %c0_2 = arith.constant 0 : index
    %1 = vector.load %arg1[%c0_1, %c0_2] : memref<25x1152xbf16, #tpu.memory_space<vmem>>, vector<25x1152xbf16>
    %cst = arith.constant dense<0.000000e+00> : vector<4x1152xf32>
    %2 = tpu.matmul %0, %1, %cst {dimension_numbers = #tpu.dot_dimension_numbers<[1], [0], [0], [1], [0, 0, 1, 1], [], []>} : vector<4x25xbf16>, vector<25x1152xbf16>, vector<4x1152xf32> -> vector<4x1152xf32>
    %c0_3 = arith.constant 0 : index
    %c0_4 = arith.constant 0 : index
    %3 = vector.load %arg3[%c0_3, %c0_4] : memref<4x1xf32, #tpu.memory_space<vmem>>, vector<4x1xf32>
    %4 = vector.broadcast %3 : vector<4x1xf32> to vector<4x1152xf32>
    %5 = arith.addf %2, %4 : vector<4x1152xf32>
    %cst_5 = arith.constant 0.000000e+00 : f32
    %6 = vector.broadcast %cst_5 : f32 to vector<4x1152xf32>
    %7 = arith.subf %5, %6 : vector<4x1152xf32>
    %cst_6 = arith.constant 5.000000e-01 : f32
    %8 = vector.broadcast %cst_6 : f32 to vector<4x1152xf32>
    %9 = arith.mulf %7, %8 : vector<4x1152xf32>
    %10 = arith.addf %6, %9 : vector<4x1152xf32>
    %cst_7 = arith.constant 1.000000e+00 : f32
    %11 = vector.broadcast %cst_7 : f32 to vector<4x1152xf32>
    %12 = arith.cmpf oge, %10, %11 : vector<4x1152xf32>
    %13 = arith.extui %12 : vector<4x1152xi1> to vector<4x1152xi32>
    %14 = arith.sitofp %13 : vector<4x1152xi32> to vector<4x1152xf32>
    %cst_8 = arith.constant 1.000000e+00 : f32
    %15 = vector.broadcast %cst_8 : f32 to vector<4x1152xf32>
    %16 = arith.subf %15, %14 : vector<4x1152xf32>
    %17 = arith.mulf %10, %16 : vector<4x1152xf32>
    %18 = arith.subf %5, %17 : vector<4x1152xf32>
    %cst_9 = arith.constant 5.000000e-01 : f32
    %19 = vector.broadcast %cst_9 : f32 to vector<4x1152xf32>
    %20 = arith.mulf %18, %19 : vector<4x1152xf32>
    %21 = arith.addf %17, %20 : vector<4x1152xf32>
    %cst_10 = arith.constant 1.000000e+00 : f32
    %22 = vector.broadcast %cst_10 : f32 to vector<4x1152xf32>
    %23 = arith.cmpf oge, %21, %22 : vector<4x1152xf32>
    %24 = arith.extui %23 : vector<4x1152xi1> to vector<4x1152xi32>
    %25 = arith.sitofp %24 : vector<4x1152xi32> to vector<4x1152xf32>
    %cst_11 = arith.constant 1.000000e+00 : f32
    %26 = vector.broadcast %cst_11 : f32 to vector<4x1152xf32>
    %27 = arith.subf %26, %25 : vector<4x1152xf32>
    %28 = arith.mulf %21, %27 : vector<4x1152xf32>
    %29 = arith.subf %5, %28 : vector<4x1152xf32>
    %cst_12 = arith.constant 5.000000e-01 : f32
    %30 = vector.broadcast %cst_12 : f32 to vector<4x1152xf32>
    %31 = arith.mulf %29, %30 : vector<4x1152xf32>
    %32 = arith.addf %28, %31 : vector<4x1152xf32>
    %cst_13 = arith.constant 1.000000e+00 : f32
    %33 = vector.broadcast %cst_13 : f32 to vector<4x1152xf32>
    %34 = arith.cmpf oge, %32, %33 : vector<4x1152xf32>
    %35 = arith.extui %34 : vector<4x1152xi1> to vector<4x1152xi32>
    %36 = arith.sitofp %35 : vector<4x1152xi32> to vector<4x1152xf32>
    %cst_14 = arith.constant 1.000000e+00 : f32
    %37 = vector.broadcast %cst_14 : f32 to vector<4x1152xf32>
    %38 = arith.subf %37, %36 : vector<4x1152xf32>
    %39 = arith.mulf %32, %38 : vector<4x1152xf32>
    %40 = arith.subf %5, %39 : vector<4x1152xf32>
    %cst_15 = arith.constant 5.000000e-01 : f32
    %41 = vector.broadcast %cst_15 : f32 to vector<4x1152xf32>
    %42 = arith.mulf %40, %41 : vector<4x1152xf32>
    %43 = arith.addf %39, %42 : vector<4x1152xf32>
    %cst_16 = arith.constant 1.000000e+00 : f32
    %44 = vector.broadcast %cst_16 : f32 to vector<4x1152xf32>
    %45 = arith.cmpf oge, %43, %44 : vector<4x1152xf32>
    %46 = arith.extui %45 : vector<4x1152xi1> to vector<4x1152xi32>
    %47 = arith.sitofp %46 : vector<4x1152xi32> to vector<4x1152xf32>
    %48 = tpu.concatenate %14, %25, %36, %47 in 0 : vector<4x1152xf32>, vector<4x1152xf32>, vector<4x1152xf32>, vector<4x1152xf32> -> vector<16x1152xf32>
    %49 = arith.truncf %48 : vector<16x1152xf32> to vector<16x1152xbf16>
    %c0_17 = arith.constant 0 : index
    %c0_18 = arith.constant 0 : index
    %50 = vector.load %arg4[%c0_17, %c0_18] : memref<16x1152xbf16, #tpu.memory_space<vmem>>, vector<16x1152xbf16>
    tpu.vector_store %arg4[%c0_17, %c0_18], %49 {strides = array<i32>} : memref<16x1152xbf16, #tpu.memory_space<vmem>>, vector<16x1152xbf16>,
    return
  }
  func.func @transform_0(%arg0: i32) -> (i32, i32) {
    %c0_i32 = arith.constant 0 : i32
    %c0_i32_0 = arith.constant 0 : i32
    return %c0_i32, %arg0 : i32, i32
  }
  func.func @transform_1(%arg0: i32) -> (i32, i32) {
    %c0_i32 = arith.constant 0 : i32
    %c0_i32_0 = arith.constant 0 : i32
    %c0_i32_1 = arith.constant 0 : i32
    return %c0_i32, %c0_i32_0 : i32, i32
  }
  func.func @transform_2(%arg0: i32) -> (i32, i32) {
    %c0_i32 = arith.constant 0 : i32
    %c0_i32_0 = arith.constant 0 : i32
    %c0_i32_1 = arith.constant 0 : i32
    return %c0_i32, %c0_i32_0 : i32, i32
  }
  func.func @transform_3(%arg0: i32) -> (i32, i32) {
    %c0_i32 = arith.constant 0 : i32
    %c0_i32_0 = arith.constant 0 : i32
    return %c0_i32, %arg0 : i32, i32
  }
}

module attributes {stable_mosaic.version = 11 : i64} {
  func.func @kernel(%arg0: i32, %arg1: memref<4x100x128xbf16, #tpu.memory_space<vmem>>, %arg2: memref<8x100xbf16, #tpu.memory_space<vmem>>, %arg3: memref<8x1xf32, #tpu.memory_space<vmem>>, %arg4: memref<32x128xbf16, #tpu.memory_space<vmem>>) attributes {dimension_semantics = [#tpu.dimension_semantics<parallel>], iteration_bounds = array<i64: 1>, scalar_prefetch = 0 : i64, scratch_operands = 0 : i64, tpu.core_type = #tpu.core_type<tc>, window_params = [{transform_indices = @transform_0, window_bounds = array<i64: 4, 100, 128>}, {pipeline_mode = #tpu.pipeline_mode<synchronous>, transform_indices = @transform_1, window_bounds = array<i64: 8, 100>}, {pipeline_mode = #tpu.pipeline_mode<synchronous>, transform_indices = @transform_2, window_bounds = array<i64: 8, 1>}, {transform_indices = @transform_3, window_bounds = array<i64: 32, 128>}]} {
    %c0 = arith.constant 0 : index
    %c0_0 = arith.constant 0 : index
    %0 = vector.load %arg2[%c0, %c0_0] : memref<8x100xbf16, #tpu.memory_space<vmem>>, vector<8x100xbf16>
    %c0_1 = arith.constant 0 : index
    %c0_2 = arith.constant 0 : index
    %1 = vector.load %arg3[%c0_1, %c0_2] : memref<8x1xf32, #tpu.memory_space<vmem>>, vector<8x1xf32>
    %c0_3 = arith.constant 0 : index
    %c0_4 = arith.constant 0 : index
    %c0_5 = arith.constant 0 : index
    %2 = vector.load %arg1[%c0_3, %c0_4, %c0_5] : memref<4x100x128xbf16, #tpu.memory_space<vmem>>, vector<1x100x128xbf16>
    %3 = vector.shape_cast %2 : vector<1x100x128xbf16> to vector<100x128xbf16>
    %cst = arith.constant dense<0.000000e+00> : vector<8x128xf32>
    %4 = tpu.matmul %0, %3, %cst {dimension_numbers = #tpu.dot_dimension_numbers<[1], [0], [0], [1], [0, 0, 1, 1], [], []>} : vector<8x100xbf16>, vector<100x128xbf16>, vector<8x128xf32> -> vector<8x128xf32>
    %5 = vector.broadcast %1 : vector<8x1xf32> to vector<8x128xf32>
    %6 = arith.addf %4, %5 : vector<8x128xf32>
    %cst_6 = arith.constant 0.000000e+00 : f32
    %7 = vector.broadcast %cst_6 : f32 to vector<8x128xf32>
    %8 = arith.subf %6, %7 : vector<8x128xf32>
    %cst_7 = arith.constant 5.000000e-01 : f32
    %9 = vector.broadcast %cst_7 : f32 to vector<8x128xf32>
    %10 = arith.mulf %8, %9 : vector<8x128xf32>
    %11 = arith.addf %7, %10 : vector<8x128xf32>
    %cst_8 = arith.constant 1.000000e+00 : f32
    %12 = vector.broadcast %cst_8 : f32 to vector<8x128xf32>
    %13 = arith.cmpf oge, %11, %12 : vector<8x128xf32>
    %14 = arith.extui %13 : vector<8x128xi1> to vector<8x128xi32>
    %15 = arith.sitofp %14 : vector<8x128xi32> to vector<8x128xf32>
    %cst_9 = arith.constant 1.000000e+00 : f32
    %16 = vector.broadcast %cst_9 : f32 to vector<8x128xf32>
    %17 = arith.subf %16, %15 : vector<8x128xf32>
    %18 = arith.mulf %11, %17 : vector<8x128xf32>
    %c1 = arith.constant 1 : index
    %c0_10 = arith.constant 0 : index
    %c0_11 = arith.constant 0 : index
    %19 = vector.load %arg1[%c1, %c0_10, %c0_11] : memref<4x100x128xbf16, #tpu.memory_space<vmem>>, vector<1x100x128xbf16>
    %20 = vector.shape_cast %19 : vector<1x100x128xbf16> to vector<100x128xbf16>
    %cst_12 = arith.constant dense<0.000000e+00> : vector<8x128xf32>
    %21 = tpu.matmul %0, %20, %cst_12 {dimension_numbers = #tpu.dot_dimension_numbers<[1], [0], [0], [1], [0, 0, 1, 1], [], []>} : vector<8x100xbf16>, vector<100x128xbf16>, vector<8x128xf32> -> vector<8x128xf32>
    %22 = vector.broadcast %1 : vector<8x1xf32> to vector<8x128xf32>
    %23 = arith.addf %21, %22 : vector<8x128xf32>
    %24 = arith.subf %23, %18 : vector<8x128xf32>
    %cst_13 = arith.constant 5.000000e-01 : f32
    %25 = vector.broadcast %cst_13 : f32 to vector<8x128xf32>
    %26 = arith.mulf %24, %25 : vector<8x128xf32>
    %27 = arith.addf %18, %26 : vector<8x128xf32>
    %cst_14 = arith.constant 1.000000e+00 : f32
    %28 = vector.broadcast %cst_14 : f32 to vector<8x128xf32>
    %29 = arith.cmpf oge, %27, %28 : vector<8x128xf32>
    %30 = arith.extui %29 : vector<8x128xi1> to vector<8x128xi32>
    %31 = arith.sitofp %30 : vector<8x128xi32> to vector<8x128xf32>
    %cst_15 = arith.constant 1.000000e+00 : f32
    %32 = vector.broadcast %cst_15 : f32 to vector<8x128xf32>
    %33 = arith.subf %32, %31 : vector<8x128xf32>
    %34 = arith.mulf %27, %33 : vector<8x128xf32>
    %c2 = arith.constant 2 : index
    %c0_16 = arith.constant 0 : index
    %c0_17 = arith.constant 0 : index
    %35 = vector.load %arg1[%c2, %c0_16, %c0_17] : memref<4x100x128xbf16, #tpu.memory_space<vmem>>, vector<1x100x128xbf16>
    %36 = vector.shape_cast %35 : vector<1x100x128xbf16> to vector<100x128xbf16>
    %cst_18 = arith.constant dense<0.000000e+00> : vector<8x128xf32>
    %37 = tpu.matmul %0, %36, %cst_18 {dimension_numbers = #tpu.dot_dimension_numbers<[1], [0], [0], [1], [0, 0, 1, 1], [], []>} : vector<8x100xbf16>, vector<100x128xbf16>, vector<8x128xf32> -> vector<8x128xf32>
    %38 = vector.broadcast %1 : vector<8x1xf32> to vector<8x128xf32>
    %39 = arith.addf %37, %38 : vector<8x128xf32>
    %40 = arith.subf %39, %34 : vector<8x128xf32>
    %cst_19 = arith.constant 5.000000e-01 : f32
    %41 = vector.broadcast %cst_19 : f32 to vector<8x128xf32>
    %42 = arith.mulf %40, %41 : vector<8x128xf32>
    %43 = arith.addf %34, %42 : vector<8x128xf32>
    %cst_20 = arith.constant 1.000000e+00 : f32
    %44 = vector.broadcast %cst_20 : f32 to vector<8x128xf32>
    %45 = arith.cmpf oge, %43, %44 : vector<8x128xf32>
    %46 = arith.extui %45 : vector<8x128xi1> to vector<8x128xi32>
    %47 = arith.sitofp %46 : vector<8x128xi32> to vector<8x128xf32>
    %cst_21 = arith.constant 1.000000e+00 : f32
    %48 = vector.broadcast %cst_21 : f32 to vector<8x128xf32>
    %49 = arith.subf %48, %47 : vector<8x128xf32>
    %50 = arith.mulf %43, %49 : vector<8x128xf32>
    %c3 = arith.constant 3 : index
    %c0_22 = arith.constant 0 : index
    %c0_23 = arith.constant 0 : index
    %51 = vector.load %arg1[%c3, %c0_22, %c0_23] : memref<4x100x128xbf16, #tpu.memory_space<vmem>>, vector<1x100x128xbf16>
    %52 = vector.shape_cast %51 : vector<1x100x128xbf16> to vector<100x128xbf16>
    %cst_24 = arith.constant dense<0.000000e+00> : vector<8x128xf32>
    %53 = tpu.matmul %0, %52, %cst_24 {dimension_numbers = #tpu.dot_dimension_numbers<[1], [0], [0], [1], [0, 0, 1, 1], [], []>} : vector<8x100xbf16>, vector<100x128xbf16>, vector<8x128xf32> -> vector<8x128xf32>
    %54 = vector.broadcast %1 : vector<8x1xf32> to vector<8x128xf32>
    %55 = arith.addf %53, %54 : vector<8x128xf32>
    %56 = arith.subf %55, %50 : vector<8x128xf32>
    %cst_25 = arith.constant 5.000000e-01 : f32
    %57 = vector.broadcast %cst_25 : f32 to vector<8x128xf32>
    %58 = arith.mulf %56, %57 : vector<8x128xf32>
    %59 = arith.addf %50, %58 : vector<8x128xf32>
    %cst_26 = arith.constant 1.000000e+00 : f32
    %60 = vector.broadcast %cst_26 : f32 to vector<8x128xf32>
    %61 = arith.cmpf oge, %59, %60 : vector<8x128xf32>
    %62 = arith.extui %61 : vector<8x128xi1> to vector<8x128xi32>
    %63 = arith.sitofp %62 : vector<8x128xi32> to vector<8x128xf32>
    %64 = tpu.concatenate %15, %31, %47, %63 in 0 : vector<8x128xf32>, vector<8x128xf32>, vector<8x128xf32>, vector<8x128xf32> -> vector<32x128xf32>
    %65 = arith.truncf %64 : vector<32x128xf32> to vector<32x128xbf16>
    %c0_27 = arith.constant 0 : index
    %c0_28 = arith.constant 0 : index
    %66 = vector.load %arg4[%c0_27, %c0_28] : memref<32x128xbf16, #tpu.memory_space<vmem>>, vector<32x128xbf16>
    tpu.vector_store %arg4[%c0_27, %c0_28], %65 {strides = array<i32>} : memref<32x128xbf16, #tpu.memory_space<vmem>>, vector<32x128xbf16>,
    return
  }
  func.func @transform_0(%arg0: i32) -> (i32, i32, i32) {
    %c0_i32 = arith.constant 0 : i32
    %c0_i32_0 = arith.constant 0 : i32
    %c0_i32_1 = arith.constant 0 : i32
    return %c0_i32, %c0_i32_0, %arg0 : i32, i32, i32
  }
  func.func @transform_1(%arg0: i32) -> (i32, i32) {
    %c0_i32 = arith.constant 0 : i32
    %c0_i32_0 = arith.constant 0 : i32
    %c0_i32_1 = arith.constant 0 : i32
    return %c0_i32, %c0_i32_0 : i32, i32
  }
  func.func @transform_2(%arg0: i32) -> (i32, i32) {
    %c0_i32 = arith.constant 0 : i32
    %c0_i32_0 = arith.constant 0 : i32
    %c0_i32_1 = arith.constant 0 : i32
    return %c0_i32, %c0_i32_0 : i32, i32
  }
  func.func @transform_3(%arg0: i32) -> (i32, i32) {
    %c0_i32 = arith.constant 0 : i32
    %c0_i32_0 = arith.constant 0 : i32
    return %c0_i32, %arg0 : i32, i32
  }
}

module attributes {stable_mosaic.version = 11 : i64} {
  func.func @kernel(%arg0: i32, %arg1: memref<4x128x2xbf16, #tpu.memory_space<vmem>>, %arg2: memref<10x128xbf16, #tpu.memory_space<vmem>>, %arg3: memref<10x1xf32, #tpu.memory_space<vmem>>, %arg4: memref<10x2xf32, #tpu.memory_space<vmem>>) attributes {dimension_semantics = [#tpu.dimension_semantics<parallel>], iteration_bounds = array<i64: 1>, scalar_prefetch = 0 : i64, scratch_operands = 0 : i64, tpu.core_type = #tpu.core_type<tc>, window_params = [{transform_indices = @transform_0, window_bounds = array<i64: 4, 128, 2>}, {pipeline_mode = #tpu.pipeline_mode<synchronous>, transform_indices = @transform_1, window_bounds = array<i64: 10, 128>}, {pipeline_mode = #tpu.pipeline_mode<synchronous>, transform_indices = @transform_2, window_bounds = array<i64: 10, 1>}, {transform_indices = @transform_3, window_bounds = array<i64: 10, 2>}]} {
    %c0 = arith.constant 0 : index
    %c0_0 = arith.constant 0 : index
    %0 = vector.load %arg2[%c0, %c0_0] : memref<10x128xbf16, #tpu.memory_space<vmem>>, vector<10x128xbf16>
    %c0_1 = arith.constant 0 : index
    %c0_2 = arith.constant 0 : index
    %1 = vector.load %arg3[%c0_1, %c0_2] : memref<10x1xf32, #tpu.memory_space<vmem>>, vector<10x1xf32>
    %c0_3 = arith.constant 0 : index
    %c0_4 = arith.constant 0 : index
    %c0_5 = arith.constant 0 : index
    %2 = vector.load %arg1[%c0_3, %c0_4, %c0_5] : memref<4x128x2xbf16, #tpu.memory_space<vmem>>, vector<1x128x2xbf16>
    %3 = vector.shape_cast %2 : vector<1x128x2xbf16> to vector<128x2xbf16>
    %cst = arith.constant dense<0.000000e+00> : vector<10x2xf32>
    %4 = tpu.matmul %0, %3, %cst {dimension_numbers = #tpu.dot_dimension_numbers<[1], [0], [0], [1], [0, 0, 1, 1], [], []>} : vector<10x128xbf16>, vector<128x2xbf16>, vector<10x2xf32> -> vector<10x2xf32>
    %5 = vector.broadcast %1 : vector<10x1xf32> to vector<10x2xf32>
    %6 = arith.addf %4, %5 : vector<10x2xf32>
    %cst_6 = arith.constant 0.000000e+00 : f32
    %7 = vector.broadcast %cst_6 : f32 to vector<10x2xf32>
    %cst_7 = arith.constant 0.000000e+00 : f32
    %8 = vector.broadcast %cst_7 : f32 to vector<10x2xf32>
    %9 = arith.subf %6, %7 : vector<10x2xf32>
    %cst_8 = arith.constant 5.000000e-01 : f32
    %10 = vector.broadcast %cst_8 : f32 to vector<10x2xf32>
    %11 = arith.mulf %9, %10 : vector<10x2xf32>
    %12 = arith.addf %7, %11 : vector<10x2xf32>
    %cst_9 = arith.constant 1.000000e+00 : f32
    %13 = vector.broadcast %cst_9 : f32 to vector<10x2xf32>
    %14 = arith.cmpf oge, %12, %13 : vector<10x2xf32>
    %15 = arith.extui %14 : vector<10x2xi1> to vector<10x2xi32>
    %16 = arith.sitofp %15 : vector<10x2xi32> to vector<10x2xf32>
    %17 = arith.addf %8, %16 : vector<10x2xf32>
    %cst_10 = arith.constant 1.000000e+00 : f32
    %18 = vector.broadcast %cst_10 : f32 to vector<10x2xf32>
    %19 = arith.subf %18, %16 : vector<10x2xf32>
    %20 = arith.mulf %12, %19 : vector<10x2xf32>
    %c1 = arith.constant 1 : index
    %c0_11 = arith.constant 0 : index
    %c0_12 = arith.constant 0 : index
    %21 = vector.load %arg1[%c1, %c0_11, %c0_12] : memref<4x128x2xbf16, #tpu.memory_space<vmem>>, vector<1x128x2xbf16>
    %22 = vector.shape_cast %21 : vector<1x128x2xbf16> to vector<128x2xbf16>
    %cst_13 = arith.constant dense<0.000000e+00> : vector<10x2xf32>
    %23 = tpu.matmul %0, %22, %cst_13 {dimension_numbers = #tpu.dot_dimension_numbers<[1], [0], [0], [1], [0, 0, 1, 1], [], []>} : vector<10x128xbf16>, vector<128x2xbf16>, vector<10x2xf32> -> vector<10x2xf32>
    %24 = vector.broadcast %1 : vector<10x1xf32> to vector<10x2xf32>
    %25 = arith.addf %23, %24 : vector<10x2xf32>
    %26 = arith.subf %25, %20 : vector<10x2xf32>
    %cst_14 = arith.constant 5.000000e-01 : f32
    %27 = vector.broadcast %cst_14 : f32 to vector<10x2xf32>
    %28 = arith.mulf %26, %27 : vector<10x2xf32>
    %29 = arith.addf %20, %28 : vector<10x2xf32>
    %cst_15 = arith.constant 1.000000e+00 : f32
    %30 = vector.broadcast %cst_15 : f32 to vector<10x2xf32>
    %31 = arith.cmpf oge, %29, %30 : vector<10x2xf32>
    %32 = arith.extui %31 : vector<10x2xi1> to vector<10x2xi32>
    %33 = arith.sitofp %32 : vector<10x2xi32> to vector<10x2xf32>
    %34 = arith.addf %17, %33 : vector<10x2xf32>
    %cst_16 = arith.constant 1.000000e+00 : f32
    %35 = vector.broadcast %cst_16 : f32 to vector<10x2xf32>
    %36 = arith.subf %35, %33 : vector<10x2xf32>
    %37 = arith.mulf %29, %36 : vector<10x2xf32>
    %c2 = arith.constant 2 : index
    %c0_17 = arith.constant 0 : index
    %c0_18 = arith.constant 0 : index
    %38 = vector.load %arg1[%c2, %c0_17, %c0_18] : memref<4x128x2xbf16, #tpu.memory_space<vmem>>, vector<1x128x2xbf16>
    %39 = vector.shape_cast %38 : vector<1x128x2xbf16> to vector<128x2xbf16>
    %cst_19 = arith.constant dense<0.000000e+00> : vector<10x2xf32>
    %40 = tpu.matmul %0, %39, %cst_19 {dimension_numbers = #tpu.dot_dimension_numbers<[1], [0], [0], [1], [0, 0, 1, 1], [], []>} : vector<10x128xbf16>, vector<128x2xbf16>, vector<10x2xf32> -> vector<10x2xf32>
    %41 = vector.broadcast %1 : vector<10x1xf32> to vector<10x2xf32>
    %42 = arith.addf %40, %41 : vector<10x2xf32>
    %43 = arith.subf %42, %37 : vector<10x2xf32>
    %cst_20 = arith.constant 5.000000e-01 : f32
    %44 = vector.broadcast %cst_20 : f32 to vector<10x2xf32>
    %45 = arith.mulf %43, %44 : vector<10x2xf32>
    %46 = arith.addf %37, %45 : vector<10x2xf32>
    %cst_21 = arith.constant 1.000000e+00 : f32
    %47 = vector.broadcast %cst_21 : f32 to vector<10x2xf32>
    %48 = arith.cmpf oge, %46, %47 : vector<10x2xf32>
    %49 = arith.extui %48 : vector<10x2xi1> to vector<10x2xi32>
    %50 = arith.sitofp %49 : vector<10x2xi32> to vector<10x2xf32>
    %51 = arith.addf %34, %50 : vector<10x2xf32>
    %cst_22 = arith.constant 1.000000e+00 : f32
    %52 = vector.broadcast %cst_22 : f32 to vector<10x2xf32>
    %53 = arith.subf %52, %50 : vector<10x2xf32>
    %54 = arith.mulf %46, %53 : vector<10x2xf32>
    %c3 = arith.constant 3 : index
    %c0_23 = arith.constant 0 : index
    %c0_24 = arith.constant 0 : index
    %55 = vector.load %arg1[%c3, %c0_23, %c0_24] : memref<4x128x2xbf16, #tpu.memory_space<vmem>>, vector<1x128x2xbf16>
    %56 = vector.shape_cast %55 : vector<1x128x2xbf16> to vector<128x2xbf16>
    %cst_25 = arith.constant dense<0.000000e+00> : vector<10x2xf32>
    %57 = tpu.matmul %0, %56, %cst_25 {dimension_numbers = #tpu.dot_dimension_numbers<[1], [0], [0], [1], [0, 0, 1, 1], [], []>} : vector<10x128xbf16>, vector<128x2xbf16>, vector<10x2xf32> -> vector<10x2xf32>
    %58 = vector.broadcast %1 : vector<10x1xf32> to vector<10x2xf32>
    %59 = arith.addf %57, %58 : vector<10x2xf32>
    %60 = arith.subf %59, %54 : vector<10x2xf32>
    %cst_26 = arith.constant 5.000000e-01 : f32
    %61 = vector.broadcast %cst_26 : f32 to vector<10x2xf32>
    %62 = arith.mulf %60, %61 : vector<10x2xf32>
    %63 = arith.addf %54, %62 : vector<10x2xf32>
    %cst_27 = arith.constant 1.000000e+00 : f32
    %64 = vector.broadcast %cst_27 : f32 to vector<10x2xf32>
    %65 = arith.cmpf oge, %63, %64 : vector<10x2xf32>
    %66 = arith.extui %65 : vector<10x2xi1> to vector<10x2xi32>
    %67 = arith.sitofp %66 : vector<10x2xi32> to vector<10x2xf32>
    %68 = arith.addf %51, %67 : vector<10x2xf32>
    %cst_28 = arith.constant 2.500000e-01 : f32
    %69 = vector.broadcast %cst_28 : f32 to vector<10x2xf32>
    %70 = arith.mulf %68, %69 : vector<10x2xf32>
    %c0_29 = arith.constant 0 : index
    %c0_30 = arith.constant 0 : index
    %71 = vector.load %arg4[%c0_29, %c0_30] : memref<10x2xf32, #tpu.memory_space<vmem>>, vector<10x2xf32>
    tpu.vector_store %arg4[%c0_29, %c0_30], %70 {strides = array<i32>} : memref<10x2xf32, #tpu.memory_space<vmem>>, vector<10x2xf32>,
    return
  }
  func.func @transform_0(%arg0: i32) -> (i32, i32, i32) {
    %c0_i32 = arith.constant 0 : i32
    %c0_i32_0 = arith.constant 0 : i32
    %c0_i32_1 = arith.constant 0 : i32
    return %c0_i32, %c0_i32_0, %arg0 : i32, i32, i32
  }
  func.func @transform_1(%arg0: i32) -> (i32, i32) {
    %c0_i32 = arith.constant 0 : i32
    %c0_i32_0 = arith.constant 0 : i32
    %c0_i32_1 = arith.constant 0 : i32
    return %c0_i32, %c0_i32_0 : i32, i32
  }
  func.func @transform_2(%arg0: i32) -> (i32, i32) {
    %c0_i32 = arith.constant 0 : i32
    %c0_i32_0 = arith.constant 0 : i32
    %c0_i32_1 = arith.constant 0 : i32
    return %c0_i32, %c0_i32_0 : i32, i32
  }
  func.func @transform_3(%arg0: i32) -> (i32, i32) {
    %c0_i32 = arith.constant 0 : i32
    %c0_i32_0 = arith.constant 0 : i32
    return %c0_i32, %arg0 : i32, i32
  }
}

</mosaic_0001>

<llo_original>
// kernel: axon_sddtp_csnn_forward.3
$region0: #{axon_sddtp_csnn_forward.3}
  #allocation0 [shape = 'u32[]', space=smem, size = 0x4, offset = 0x4, fixed_abs, tag = 'smem constant byte address 0x4 - core index']
  #allocation1 [shape = 'u32[72,128]{1,0:T(1,128)}', space=vmem, size = 0x9000, scoped, tag = 'internal scratch']
  %s0 = inlined_call_operand.vmem [shape: bf16[25,1152], index: 0, kind: input, shape index: {}]
  %s1 = inlined_call_operand.vmem [shape: bf16[4,25], index: 1, kind: input, shape index: {}]
  %s2 = inlined_call_operand.vmem [shape: f32[4,1], index: 2, kind: input, shape index: {}]
  %s3 = inlined_call_operand.vmem [shape: bf16[16,1152], index: 3, kind: output, shape index: {}]
  %s4 = sld [smem:[#allocation0]]
  $region22: #{axon_sddtp_csnn_forward.3} parent=0
    _
  %s6 = ssub.s32 1, %s4
  %s7 = scalar_select 0, %s6, %s4
  // Predicated region
  $region2: #{axon_sddtp_csnn_forward.3} parent=0 // pred_check
    _
  $region3: #{axon_sddtp_csnn_forward.3} parent=0 // pred_check_branch
    %9 = sbr.rel (0) target = $region5
  $region4: #{axon_sddtp_csnn_forward.3} parent=0 // pred_region
    _
  $region5: #{axon_sddtp_csnn_forward.3} parent=0 // pred_fallthru
    _
  // Predicated region
  $region6: #{axon_sddtp_csnn_forward.3} parent=0 // pred_check
    _
  $region7: #{axon_sddtp_csnn_forward.3} parent=0 // pred_check_branch
    %11 = sbr.rel (0) target = $region9
  $region8: #{axon_sddtp_csnn_forward.3} parent=0 // pred_region
    _
  $region9: #{axon_sddtp_csnn_forward.3} parent=0 // pred_fallthru
    _
  // Predicated region
  $region10: #{axon_sddtp_csnn_forward.3} parent=0 // pred_check
    _
  $region11: #{axon_sddtp_csnn_forward.3} parent=0 // pred_check_branch
    %13 = sbr.rel (0) target = $region13
  $region12: #{axon_sddtp_csnn_forward.3} parent=0 // pred_region
    _
  $region13: #{axon_sddtp_csnn_forward.3} parent=0 // pred_fallthru
    _
  %v15 = vld [vmem:[%s1] sm:$0x3]
  %v16 = vld [vmem:[%s0] sm:$0xff]
  %v17 = vld [vmem:[%s0 + $0x8] sm:$0xff]
  %v18 = vld [vmem:[%s0 + $0x10] sm:$0xff]
  %v19 = vld [vmem:[%s0 + $0x18] sm:$0xff]
  %v20 = vld [vmem:[%s0 + $0x20] sm:$0xf]
  %v21 = vld [vmem:[%s0 + $0x24] sm:$0xff]
  %v22 = vld [vmem:[%s0 + $0x2c] sm:$0xff]
  %v23 = vld [vmem:[%s0 + $0x34] sm:$0xff]
  %v24 = vld [vmem:[%s0 + $0x3c] sm:$0xff]
  %v25 = vld [vmem:[%s0 + $0x44] sm:$0xf]
  %v26 = vld [vmem:[%s0 + $0x48] sm:$0xff]
  %v27 = vld [vmem:[%s0 + $0x50] sm:$0xff]
  %v28 = vld [vmem:[%s0 + $0x58] sm:$0xff]
  %v29 = vld [vmem:[%s0 + $0x60] sm:$0xff]
  %v30 = vld [vmem:[%s0 + $0x68] sm:$0xf]
  %v31 = vld [vmem:[%s0 + $0x6c] sm:$0x11]
  %v32 = vld [vmem:[%s0 + $0x74] sm:$0x11]
  %v33 = vld [vmem:[%s0 + $0x7c] sm:$0x11]
  %v34 = vld [vmem:[%s0 + $0x84] sm:$0x11]
  %v35 = vld [vmem:[%s0 + $0x8c] sm:$0x1]
  %v36 = vld [vmem:[%s2] sm:$0xf]
  %38 = vset.pattern.permute.xlu0 0
  %39 = vperm.xlu0 %38, %v36
  %v40 = vpop.permute.xlu0 %39
  %v62 = vunpack.c.l.b16 %v16
  %v63 = vunpack.c.h.b16 %v16
  %v64 = vunpack.c.l.b16 %v17
  %v65 = vunpack.c.h.b16 %v17
  %v66 = vunpack.c.l.b16 %v18
  %v67 = vunpack.c.h.b16 %v18
  %v68 = vunpack.c.l.b16 %v19
  %v69 = vunpack.c.h.b16 %v19
  %v70 = vunpack.c.l.b16 %v20
  %v71 = vunpack.c.l.b16 %v21
  %v72 = vunpack.c.h.b16 %v21
  %v73 = vunpack.c.l.b16 %v22
  %v74 = vunpack.c.h.b16 %v22
  %v75 = vunpack.c.l.b16 %v23
  %v76 = vunpack.c.h.b16 %v23
  %v77 = vunpack.c.l.b16 %v24
  %v78 = vunpack.c.h.b16 %v24
  %v79 = vunpack.c.l.b16 %v25
  %v80 = vunpack.c.l.b16 %v26
  %v81 = vunpack.c.h.b16 %v26
  %v82 = vunpack.c.l.b16 %v27
  %v83 = vunpack.c.h.b16 %v27
  %v84 = vunpack.c.l.b16 %v28
  %v85 = vunpack.c.h.b16 %v28
  %v86 = vunpack.c.l.b16 %v29
  %v87 = vunpack.c.h.b16 %v29
  %v88 = vunpack.c.l.b16 %v30
  %v89 = vunpack.c.l.b16 %v31
  %v90 = vunpack.c.h.b16 %v31
  %v91 = vunpack.c.l.b16 %v32
  %v92 = vunpack.c.h.b16 %v32
  %v93 = vunpack.c.l.b16 %v33
  %v94 = vunpack.c.h.b16 %v33
  %v95 = vunpack.c.l.b16 %v34
  %v96 = vunpack.c.h.b16 %v34
  %v97 = vunpack.c.l.b16 %v35
  %v98 = vpack.c.b16 %v71, %v62
  %v99 = vpack.c.b16 %v72, %v63
  %v100 = vpack.c.b16 %v73, %v64
  %v101 = vpack.c.b16 %v74, %v65
  %v102 = vpack.c.b16 %v75, %v66
  %v103 = vpack.c.b16 %v76, %v67
  %v104 = vpack.c.b16 %v77, %v68
  %v105 = vpack.c.b16 %v78, %v69
  %v106 = vpack.c.b16 %v79, %v70
  %v107 = vpack.c.b16 %v89, %v80
  %v108 = vpack.c.b16 %v90, %v81
  %v109 = vpack.c.b16 %v91, %v82
  %v110 = vpack.c.b16 %v92, %v83
  %v111 = vpack.c.b16 %v93, %v84
  %v112 = vpack.c.b16 %v94, %v85
  %v113 = vpack.c.b16 %v95, %v86
  %v114 = vpack.c.b16 %v96, %v87
  %v115 = vpack.c.b16 %v97, %v88
  %vm125 = vcmask 203776
  %v127 = vsel %vm125, %v15, 0
  %vm129 = vcmask 1043456
  %vm130 = vcmask 1044480
  %v131 = vsel %vm129, 4294967295, 65535
  %v132 = vsel %vm130, %v131, 0
  %v134 = vand.u32 %v107, %v132
  %v137 = vand.u32 %v108, %v132
  %v140 = vand.u32 %v109, %v132
  %v143 = vand.u32 %v110, %v132
  %v146 = vand.u32 %v111, %v132
  %v149 = vand.u32 %v112, %v132
  %v152 = vand.u32 %v113, %v132
  %v155 = vand.u32 %v114, %v132
  %v158 = vand.u32 %v115, %v132
  %160 = vmatpush.bf16.msra.mxu0 0
  %161 = vmatpush.bf16.msra.mxu0 0
  %162 = vmatpush.bf16.msra.mxu0 0
  %163 = vmatpush.bf16.msra.mxu0 0
  %164 = vmatpush.bf16.msra.mxu0 0
  %165 = vmatpush.bf16.msra.mxu0 0
  %166 = vmatpush.bf16.msra.mxu0 %v134
  %167 = vmatpush.bf16.msra.mxu0 %v98
  %168 = vmatmul.bf16.gmra.mxu0 %v127
  %v169 = vpop.f32.mrf.mxu0
  %v170 = vadd.f32 %v40, %v169
  %v171 = vpop.f32.mrf.mxu0
  %172 = vdwg.mxu0
  %173 = vmatpush.bf16.msra.mxu0 0
  %174 = vmatpush.bf16.msra.mxu0 0
  %175 = vmatpush.bf16.msra.mxu0 0
  %176 = vmatpush.bf16.msra.mxu0 0
  %177 = vmatpush.bf16.msra.mxu0 0
  %178 = vmatpush.bf16.msra.mxu0 0
  %179 = vmatpush.bf16.msra.mxu0 %v137
  %180 = vmatpush.bf16.msra.mxu0 %v99
  %181 = vmatmul.bf16.gmra.mxu0 %v127
  %v182 = vpop.f32.mrf.mxu0
  %v183 = vadd.f32 %v40, %v182
  %v184 = vpop.f32.mrf.mxu0
  %185 = vdwg.mxu0
  %186 = vmatpush.bf16.msra.mxu0 0
  %187 = vmatpush.bf16.msra.mxu0 0
  %188 = vmatpush.bf16.msra.mxu0 0
  %189 = vmatpush.bf16.msra.mxu0 0
  %190 = vmatpush.bf16.msra.mxu0 0
  %191 = vmatpush.bf16.msra.mxu0 0
  %192 = vmatpush.bf16.msra.mxu0 %v140
  %193 = vmatpush.bf16.msra.mxu0 %v100
  %194 = vmatmul.bf16.gmra.mxu0 %v127
  %v195 = vpop.f32.mrf.mxu0
  %v196 = vadd.f32 %v40, %v195
  %v197 = vpop.f32.mrf.mxu0
  %198 = vdwg.mxu0
  %199 = vmatpush.bf16.msra.mxu0 0
  %200 = vmatpush.bf16.msra.mxu0 0
  %201 = vmatpush.bf16.msra.mxu0 0
  %202 = vmatpush.bf16.msra.mxu0 0
  %203 = vmatpush.bf16.msra.mxu0 0
  %204 = vmatpush.bf16.msra.mxu0 0
  %205 = vmatpush.bf16.msra.mxu0 %v143
  %206 = vmatpush.bf16.msra.mxu0 %v101
  %207 = vmatmul.bf16.gmra.mxu0 %v127
  %v208 = vpop.f32.mrf.mxu0
  %v209 = vadd.f32 %v40, %v208
  %v210 = vpop.f32.mrf.mxu0
  %211 = vdwg.mxu0
  %212 = vmatpush.bf16.msra.mxu0 0
  %213 = vmatpush.bf16.msra.mxu0 0
  %214 = vmatpush.bf16.msra.mxu0 0
  %215 = vmatpush.bf16.msra.mxu0 0
  %216 = vmatpush.bf16.msra.mxu0 0
  %217 = vmatpush.bf16.msra.mxu0 0
  %218 = vmatpush.bf16.msra.mxu0 %v146
  %219 = vmatpush.bf16.msra.mxu0 %v102
  %220 = vmatmul.bf16.gmra.mxu0 %v127
  %v221 = vpop.f32.mrf.mxu0
  %v222 = vadd.f32 %v40, %v221
  %v223 = vpop.f32.mrf.mxu0
  %224 = vdwg.mxu0
  %225 = vmatpush.bf16.msra.mxu0 0
  %226 = vmatpush.bf16.msra.mxu0 0
  %227 = vmatpush.bf16.msra.mxu0 0
  %228 = vmatpush.bf16.msra.mxu0 0
  %229 = vmatpush.bf16.msra.mxu0 0
  %230 = vmatpush.bf16.msra.mxu0 0
  %231 = vmatpush.bf16.msra.mxu0 %v149
  %232 = vmatpush.bf16.msra.mxu0 %v103
  %233 = vmatmul.bf16.gmra.mxu0 %v127
  %v234 = vpop.f32.mrf.mxu0
  %v235 = vadd.f32 %v40, %v234
  %v236 = vpop.f32.mrf.mxu0
  %237 = vdwg.mxu0
  %238 = vmatpush.bf16.msra.mxu0 0
  %239 = vmatpush.bf16.msra.mxu0 0
  %240 = vmatpush.bf16.msra.mxu0 0
  %241 = vmatpush.bf16.msra.mxu0 0
  %242 = vmatpush.bf16.msra.mxu0 0
  %243 = vmatpush.bf16.msra.mxu0 0
  %244 = vmatpush.bf16.msra.mxu0 %v152
  %245 = vmatpush.bf16.msra.mxu0 %v104
  %246 = vmatmul.bf16.gmra.mxu0 %v127
  %v247 = vpop.f32.mrf.mxu0
  %v248 = vadd.f32 %v40, %v247
  %v249 = vpop.f32.mrf.mxu0
  %250 = vdwg.mxu0
  %251 = vmatpush.bf16.msra.mxu0 0
  %252 = vmatpush.bf16.msra.mxu0 0
  %253 = vmatpush.bf16.msra.mxu0 0
  %254 = vmatpush.bf16.msra.mxu0 0
  %255 = vmatpush.bf16.msra.mxu0 0
  %256 = vmatpush.bf16.msra.mxu0 0
  %257 = vmatpush.bf16.msra.mxu0 %v155
  %258 = vmatpush.bf16.msra.mxu0 %v105
  %259 = vmatmul.bf16.gmra.mxu0 %v127
  %v260 = vpop.f32.mrf.mxu0
  %v261 = vadd.f32 %v40, %v260
  %v262 = vpop.f32.mrf.mxu0
  %263 = vdwg.mxu0
  %264 = vmatpush.bf16.msra.mxu0 0
  %265 = vmatpush.bf16.msra.mxu0 0
  %266 = vmatpush.bf16.msra.mxu0 0
  %267 = vmatpush.bf16.msra.mxu0 0
  %268 = vmatpush.bf16.msra.mxu0 0
  %269 = vmatpush.bf16.msra.mxu0 0
  %270 = vmatpush.bf16.msra.mxu0 %v158
  %271 = vmatpush.bf16.msra.mxu0 %v106
  %272 = vmatmul.bf16.gmra.mxu0 %v127
  %v273 = vpop.f32.mrf.mxu0
  %v274 = vadd.f32 %v40, %v273
  %v275 = vpop.f32.mrf.mxu0
  %276 = vdwg.mxu0
  %v277 = vmul.f32 %v170, 0.5
  %v278 = vmul.f32 %v183, 0.5
  %v279 = vmul.f32 %v196, 0.5
  %v280 = vmul.f32 %v209, 0.5
  %v281 = vmul.f32 %v222, 0.5
  %v282 = vmul.f32 %v235, 0.5
  %v283 = vmul.f32 %v248, 0.5
  %v284 = vmul.f32 %v261, 0.5
  %v285 = vmul.f32 %v274, 0.5
  %v286 = vadd.f32 %v277, 0.0
  %v287 = vadd.f32 %v278, 0.0
  %v288 = vadd.f32 %v279, 0.0
  %v289 = vadd.f32 %v280, 0.0
  %v290 = vadd.f32 %v281, 0.0
  %v291 = vadd.f32 %v282, 0.0
  %v292 = vadd.f32 %v283, 0.0
  %v293 = vadd.f32 %v284, 0.0
  %v294 = vadd.f32 %v285, 0.0
  %vm295 = vcmp.ge.f32.partialorder %v286, 1.0
  %vm296 = vcmp.ge.f32.partialorder %v287, 1.0
  %vm297 = vcmp.ge.f32.partialorder %v288, 1.0
  %vm298 = vcmp.ge.f32.partialorder %v289, 1.0
  %vm299 = vcmp.ge.f32.partialorder %v290, 1.0
  %vm300 = vcmp.ge.f32.partialorder %v291, 1.0
  %vm301 = vcmp.ge.f32.partialorder %v292, 1.0
  %vm302 = vcmp.ge.f32.partialorder %v293, 1.0
  %vm303 = vcmp.ge.f32.partialorder %v294, 1.0
  %v304 = vsel %vm295, 1, 0
  %v305 = vsel %vm296, 1, 0
  %v306 = vsel %vm297, 1, 0
  %v307 = vsel %vm298, 1, 0
  %v308 = vsel %vm299, 1, 0
  %v309 = vsel %vm300, 1, 0
  %v310 = vsel %vm301, 1, 0
  %v311 = vsel %vm302, 1, 0
  %v312 = vsel %vm303, 1, 0
  %v313 = vcvt.s32.f32 %v304
  %v314 = vcvt.s32.f32 %v305
  %v315 = vcvt.s32.f32 %v306
  %v316 = vcvt.s32.f32 %v307
  %v317 = vcvt.s32.f32 %v308
  %v318 = vcvt.s32.f32 %v309
  %v319 = vcvt.s32.f32 %v310
  %v320 = vcvt.s32.f32 %v311
  %v321 = vcvt.s32.f32 %v312
  %v322 = vsub.f32 1.0, %v313
  %v323 = vsub.f32 1.0, %v314
  %v324 = vsub.f32 1.0, %v315
  %v325 = vsub.f32 1.0, %v316
  %v326 = vsub.f32 1.0, %v317
  %v327 = vsub.f32 1.0, %v318
  %v328 = vsub.f32 1.0, %v319
  %v329 = vsub.f32 1.0, %v320
  %v330 = vsub.f32 1.0, %v321
  %v331 = vmul.f32 %v286, %v322
  %v332 = vmul.f32 %v287, %v323
  %v333 = vmul.f32 %v288, %v324
  %v334 = vmul.f32 %v289, %v325
  %v335 = vmul.f32 %v290, %v326
  %v336 = vmul.f32 %v291, %v327
  %v337 = vmul.f32 %v292, %v328
  %v338 = vmul.f32 %v293, %v329
  %v339 = vmul.f32 %v294, %v330
  %v340 = vsub.f32 %v170, %v331
  %v341 = vsub.f32 %v183, %v332
  %v342 = vsub.f32 %v196, %v333
  %v343 = vsub.f32 %v209, %v334
  %v344 = vsub.f32 %v222, %v335
  %v345 = vsub.f32 %v235, %v336
  %v346 = vsub.f32 %v248, %v337
  %v347 = vsub.f32 %v261, %v338
  %v348 = vsub.f32 %v274, %v339
  %v349 = vmul.f32 %v340, 0.5
  %v350 = vmul.f32 %v341, 0.5
  %v351 = vmul.f32 %v342, 0.5
  %v352 = vmul.f32 %v343, 0.5
  %v353 = vmul.f32 %v344, 0.5
  %v354 = vmul.f32 %v345, 0.5
  %v355 = vmul.f32 %v346, 0.5
  %v356 = vmul.f32 %v347, 0.5
  %v357 = vmul.f32 %v348, 0.5
  %v358 = vadd.f32 %v331, %v349
  %v359 = vadd.f32 %v332, %v350
  %v360 = vadd.f32 %v333, %v351
  %v361 = vadd.f32 %v334, %v352
  %v362 = vadd.f32 %v335, %v353
  %v363 = vadd.f32 %v336, %v354
  %v364 = vadd.f32 %v337, %v355
  %v365 = vadd.f32 %v338, %v356
  %v366 = vadd.f32 %v339, %v357
  %vm367 = vcmp.ge.f32.partialorder %v358, 1.0
  %vm368 = vcmp.ge.f32.partialorder %v359, 1.0
  %vm369 = vcmp.ge.f32.partialorder %v360, 1.0
  %vm370 = vcmp.ge.f32.partialorder %v361, 1.0
  %vm371 = vcmp.ge.f32.partialorder %v362, 1.0
  %vm372 = vcmp.ge.f32.partialorder %v363, 1.0
  %vm373 = vcmp.ge.f32.partialorder %v364, 1.0
  %vm374 = vcmp.ge.f32.partialorder %v365, 1.0
  %vm375 = vcmp.ge.f32.partialorder %v366, 1.0
  %v376 = vsel %vm367, 1, 0
  %v377 = vsel %vm368, 1, 0
  %v378 = vsel %vm369, 1, 0
  %v379 = vsel %vm370, 1, 0
  %v380 = vsel %vm371, 1, 0
  %v381 = vsel %vm372, 1, 0
  %v382 = vsel %vm373, 1, 0
  %v383 = vsel %vm374, 1, 0
  %v384 = vsel %vm375, 1, 0
  %v385 = vcvt.s32.f32 %v376
  %v386 = vcvt.s32.f32 %v377
  %v387 = vcvt.s32.f32 %v378
  %v388 = vcvt.s32.f32 %v379
  %v389 = vcvt.s32.f32 %v380
  %v390 = vcvt.s32.f32 %v381
  %v391 = vcvt.s32.f32 %v382
  %v392 = vcvt.s32.f32 %v383
  %v393 = vcvt.s32.f32 %v384
  %v394 = vsub.f32 1.0, %v385
  %v395 = vsub.f32 1.0, %v386
  %v396 = vsub.f32 1.0, %v387
  %v397 = vsub.f32 1.0, %v388
  %v398 = vsub.f32 1.0, %v389
  %v399 = vsub.f32 1.0, %v390
  %v400 = vsub.f32 1.0, %v391
  %v401 = vsub.f32 1.0, %v392
  %v402 = vsub.f32 1.0, %v393
  %v403 = vmul.f32 %v358, %v394
  %v404 = vmul.f32 %v359, %v395
  %v405 = vmul.f32 %v360, %v396
  %v406 = vmul.f32 %v361, %v397
  %v407 = vmul.f32 %v362, %v398
  %v408 = vmul.f32 %v363, %v399
  %v409 = vmul.f32 %v364, %v400
  %v410 = vmul.f32 %v365, %v401
  %v411 = vmul.f32 %v366, %v402
  %v412 = vsub.f32 %v170, %v403
  %v413 = vsub.f32 %v183, %v404
  %v414 = vsub.f32 %v196, %v405
  %v415 = vsub.f32 %v209, %v406
  %v416 = vsub.f32 %v222, %v407
  %v417 = vsub.f32 %v235, %v408
  %v418 = vsub.f32 %v248, %v409
  %v419 = vsub.f32 %v261, %v410
  %v420 = vsub.f32 %v274, %v411
  %v421 = vmul.f32 %v412, 0.5
  %v422 = vmul.f32 %v413, 0.5
  %v423 = vmul.f32 %v414, 0.5
  %v424 = vmul.f32 %v415, 0.5
  %v425 = vmul.f32 %v416, 0.5
  %v426 = vmul.f32 %v417, 0.5
  %v427 = vmul.f32 %v418, 0.5
  %v428 = vmul.f32 %v419, 0.5
  %v429 = vmul.f32 %v420, 0.5
  %v430 = vadd.f32 %v403, %v421
  %v431 = vadd.f32 %v404, %v422
  %v432 = vadd.f32 %v405, %v423
  %v433 = vadd.f32 %v406, %v424
  %v434 = vadd.f32 %v407, %v425
  %v435 = vadd.f32 %v408, %v426
  %v436 = vadd.f32 %v409, %v427
  %v437 = vadd.f32 %v410, %v428
  %v438 = vadd.f32 %v411, %v429
  %vm439 = vcmp.ge.f32.partialorder %v430, 1.0
  %vm440 = vcmp.ge.f32.partialorder %v431, 1.0
  %vm441 = vcmp.ge.f32.partialorder %v432, 1.0
  %vm442 = vcmp.ge.f32.partialorder %v433, 1.0
  %vm443 = vcmp.ge.f32.partialorder %v434, 1.0
  %vm444 = vcmp.ge.f32.partialorder %v435, 1.0
  %vm445 = vcmp.ge.f32.partialorder %v436, 1.0
  %vm446 = vcmp.ge.f32.partialorder %v437, 1.0
  %vm447 = vcmp.ge.f32.partialorder %v438, 1.0
  %v448 = vsel %vm439, 1, 0
  %v449 = vsel %vm440, 1, 0
  %v450 = vsel %vm441, 1, 0
  %v451 = vsel %vm442, 1, 0
  %v452 = vsel %vm443, 1, 0
  %v453 = vsel %vm444, 1, 0
  %v454 = vsel %vm445, 1, 0
  %v455 = vsel %vm446, 1, 0
  %v456 = vsel %vm447, 1, 0
  %v457 = vcvt.s32.f32 %v448
  %v458 = vcvt.s32.f32 %v449
  %v459 = vcvt.s32.f32 %v450
  %v460 = vcvt.s32.f32 %v451
  %v461 = vcvt.s32.f32 %v452
  %v462 = vcvt.s32.f32 %v453
  %v463 = vcvt.s32.f32 %v454
  %v464 = vcvt.s32.f32 %v455
  %v465 = vcvt.s32.f32 %v456
  %v466 = vsub.f32 1.0, %v457
  %v467 = vsub.f32 1.0, %v458
  %v468 = vsub.f32 1.0, %v459
  %v469 = vsub.f32 1.0, %v460
  %v470 = vsub.f32 1.0, %v461
  %v471 = vsub.f32 1.0, %v462
  %v472 = vsub.f32 1.0, %v463
  %v473 = vsub.f32 1.0, %v464
  %v474 = vsub.f32 1.0, %v465
  %v475 = vmul.f32 %v430, %v466
  %v476 = vmul.f32 %v431, %v467
  %v477 = vmul.f32 %v432, %v468
  %v478 = vmul.f32 %v433, %v469
  %v479 = vmul.f32 %v434, %v470
  %v480 = vmul.f32 %v435, %v471
  %v481 = vmul.f32 %v436, %v472
  %v482 = vmul.f32 %v437, %v473
  %v483 = vmul.f32 %v438, %v474
  %v484 = vsub.f32 %v170, %v475
  %v485 = vsub.f32 %v183, %v476
  %v486 = vsub.f32 %v196, %v477
  %v487 = vsub.f32 %v209, %v478
  %v488 = vsub.f32 %v222, %v479
  %v489 = vsub.f32 %v235, %v480
  %v490 = vsub.f32 %v248, %v481
  %v491 = vsub.f32 %v261, %v482
  %v492 = vsub.f32 %v274, %v483
  %v493 = vmul.f32 %v484, 0.5
  %v494 = vmul.f32 %v485, 0.5
  %v495 = vmul.f32 %v486, 0.5
  %v496 = vmul.f32 %v487, 0.5
  %v497 = vmul.f32 %v488, 0.5
  %v498 = vmul.f32 %v489, 0.5
  %v499 = vmul.f32 %v490, 0.5
  %v500 = vmul.f32 %v491, 0.5
  %v501 = vmul.f32 %v492, 0.5
  %v502 = vadd.f32 %v475, %v493
  %v503 = vadd.f32 %v476, %v494
  %v504 = vadd.f32 %v477, %v495
  %v505 = vadd.f32 %v478, %v496
  %v506 = vadd.f32 %v479, %v497
  %v507 = vadd.f32 %v480, %v498
  %v508 = vadd.f32 %v481, %v499
  %v509 = vadd.f32 %v482, %v500
  %v510 = vadd.f32 %v483, %v501
  %vm511 = vcmp.ge.f32.partialorder %v502, 1.0
  %vm512 = vcmp.ge.f32.partialorder %v503, 1.0
  %vm513 = vcmp.ge.f32.partialorder %v504, 1.0
  %vm514 = vcmp.ge.f32.partialorder %v505, 1.0
  %vm515 = vcmp.ge.f32.partialorder %v506, 1.0
  %vm516 = vcmp.ge.f32.partialorder %v507, 1.0
  %vm517 = vcmp.ge.f32.partialorder %v508, 1.0
  %vm518 = vcmp.ge.f32.partialorder %v509, 1.0
  %vm519 = vcmp.ge.f32.partialorder %v510, 1.0
  %v520 = vsel %vm511, 1, 0
  %v521 = vsel %vm512, 1, 0
  %v522 = vsel %vm513, 1, 0
  %v523 = vsel %vm514, 1, 0
  %v524 = vsel %vm515, 1, 0
  %v525 = vsel %vm516, 1, 0
  %v526 = vsel %vm517, 1, 0
  %v527 = vsel %vm518, 1, 0
  %v528 = vsel %vm519, 1, 0
  %v529 = vcvt.s32.f32 %v520
  %v530 = vcvt.s32.f32 %v521
  %v531 = vcvt.s32.f32 %v522
  %v532 = vcvt.s32.f32 %v523
  %v533 = vcvt.s32.f32 %v524
  %v534 = vcvt.s32.f32 %v525
  %v535 = vcvt.s32.f32 %v526
  %v536 = vcvt.s32.f32 %v527
  %v537 = vcvt.s32.f32 %v528
  %v547 = vrot.slane %v385, 4
  %v548 = vrot.slane %v386, 4
  %v549 = vrot.slane %v387, 4
  %v550 = vrot.slane %v388, 4
  %v551 = vrot.slane %v389, 4
  %v552 = vrot.slane %v390, 4
  %v553 = vrot.slane %v391, 4
  %v554 = vrot.slane %v392, 4
  %v555 = vrot.slane %v393, 4
  %v574 = vrot.slane %v529, 4
  %v575 = vrot.slane %v530, 4
  %v576 = vrot.slane %v531, 4
  %v577 = vrot.slane %v532, 4
  %v578 = vrot.slane %v533, 4
  %v579 = vrot.slane %v534, 4
  %v580 = vrot.slane %v535, 4
  %v581 = vrot.slane %v536, 4
  %v582 = vrot.slane %v537, 4
  %v592 = vsel %vm129, %v313, %v547
  %v593 = vsel %vm129, %v314, %v548
  %v594 = vsel %vm129, %v315, %v549
  %v595 = vsel %vm129, %v316, %v550
  %v596 = vsel %vm129, %v317, %v551
  %v597 = vsel %vm129, %v318, %v552
  %v598 = vsel %vm129, %v319, %v553
  %v599 = vsel %vm129, %v320, %v554
  %v600 = vsel %vm129, %v321, %v555
  %v601 = vsel %vm129, %v457, %v574
  %v602 = vsel %vm129, %v458, %v575
  %v603 = vsel %vm129, %v459, %v576
  %v604 = vsel %vm129, %v460, %v577
  %v605 = vsel %vm129, %v461, %v578
  %v606 = vsel %vm129, %v462, %v579
  %v607 = vsel %vm129, %v463, %v580
  %v608 = vsel %vm129, %v464, %v581
  %v609 = vsel %vm129, %v465, %v582
  %v610 = vpack.c.bf16 %v593, %v592
  %v611 = vpack.c.bf16 %v595, %v594
  %v612 = vpack.c.bf16 %v597, %v596
  %v613 = vpack.c.bf16 %v599, %v598
  %v614 = vpack.c.bf16 %v600, %v600
  %v615 = vpack.c.bf16 %v602, %v601
  %v616 = vpack.c.bf16 %v604, %v603
  %v617 = vpack.c.bf16 %v606, %v605
  %v618 = vpack.c.bf16 %v608, %v607
  %v619 = vpack.c.bf16 %v609, %v609
  %620 = vst [vmem:[%s3] sm:$0xff] %v610
  %621 = vst [vmem:[%s3 + $0x8] sm:$0xff] %v611
  %622 = vst [vmem:[%s3 + $0x10] sm:$0xff] %v612
  %623 = vst [vmem:[%s3 + $0x18] sm:$0xff] %v613
  %624 = vst [vmem:[%s3 + $0x20] sm:$0xf] %v614
  %625 = vst [vmem:[%s3 + $0x24] sm:$0xff] %v615
  %626 = vst [vmem:[%s3 + $0x2c] sm:$0xff] %v616
  %627 = vst [vmem:[%s3 + $0x34] sm:$0xff] %v617
  %628 = vst [vmem:[%s3 + $0x3c] sm:$0xff] %v618
  %629 = vst [vmem:[%s3 + $0x44] sm:$0xf] %v619
  // Predicated region
  $region14: #{axon_sddtp_csnn_forward.3} parent=0 // pred_check
    _
  $region15: #{axon_sddtp_csnn_forward.3} parent=0 // pred_check_branch
    %631 = sbr.rel (0) target = $region17
  $region16: #{axon_sddtp_csnn_forward.3} parent=0 // pred_region
    _
  $region17: #{axon_sddtp_csnn_forward.3} parent=0 // pred_fallthru
    _
  // Predicated region
  $region18: #{axon_sddtp_csnn_forward.3} parent=0 // pred_check
    _
  $region19: #{axon_sddtp_csnn_forward.3} parent=0 // pred_check_branch
    %633 = sbr.rel (0) target = $region21
  $region20: #{axon_sddtp_csnn_forward.3} parent=0 // pred_region
    _
  $region21: #{axon_sddtp_csnn_forward.3} parent=0 // pred_fallthru
    _

// kernel: axon_sddtp_csnn_forward.4
$region0: #{axon_sddtp_csnn_forward.4}
  #allocation0 [shape = 'u32[]', space=smem, size = 0x4, offset = 0x4, fixed_abs, tag = 'smem constant byte address 0x4 - core index']
  #allocation1 [shape = 'u32[72,128]{1,0:T(1,128)}', space=vmem, size = 0x9000, scoped, tag = 'internal scratch']
  %s0 = inlined_call_operand.vmem [shape: bf16[4,100,128], index: 0, kind: input, shape index: {}]
  %s1 = inlined_call_operand.vmem [shape: bf16[8,100], index: 1, kind: input, shape index: {}]
  %s2 = inlined_call_operand.vmem [shape: f32[8,1], index: 2, kind: input, shape index: {}]
  %s3 = inlined_call_operand.vmem [shape: bf16[32,128], index: 3, kind: output, shape index: {}]
  %s4 = sld [smem:[#allocation0]]
  $region22: #{axon_sddtp_csnn_forward.4} parent=0
    _
  %s6 = ssub.s32 1, %s4
  %s7 = scalar_select 0, %s6, %s4
  // Predicated region
  $region2: #{axon_sddtp_csnn_forward.4} parent=0 // pred_check
    _
  $region3: #{axon_sddtp_csnn_forward.4} parent=0 // pred_check_branch
    %9 = sbr.rel (0) target = $region5
  $region4: #{axon_sddtp_csnn_forward.4} parent=0 // pred_region
    _
  $region5: #{axon_sddtp_csnn_forward.4} parent=0 // pred_fallthru
    _
  // Predicated region
  $region6: #{axon_sddtp_csnn_forward.4} parent=0 // pred_check
    _
  $region7: #{axon_sddtp_csnn_forward.4} parent=0 // pred_check_branch
    %11 = sbr.rel (0) target = $region9
  $region8: #{axon_sddtp_csnn_forward.4} parent=0 // pred_region
    _
  $region9: #{axon_sddtp_csnn_forward.4} parent=0 // pred_fallthru
    _
  // Predicated region
  $region10: #{axon_sddtp_csnn_forward.4} parent=0 // pred_check
    _
  $region11: #{axon_sddtp_csnn_forward.4} parent=0 // pred_check_branch
    %13 = sbr.rel (0) target = $region13
  $region12: #{axon_sddtp_csnn_forward.4} parent=0 // pred_region
    _
  $region13: #{axon_sddtp_csnn_forward.4} parent=0 // pred_fallthru
    _
  %v15 = vld [vmem:[%s1] sm:$0xf]
  %v16 = vld [vmem:[%s2] sm:$0xff]
  %v17 = vld [vmem:[%s0] sm:$0xf]
  %v18 = vld [vmem:[%s0 + $0x4] sm:$0xf]
  %v19 = vld [vmem:[%s0 + $0x8] sm:$0xf]
  %v20 = vld [vmem:[%s0 + $0xc] sm:$0xf]
  %v21 = vld [vmem:[%s0 + $0x10] sm:$0xf]
  %v22 = vld [vmem:[%s0 + $0x14] sm:$0xf]
  %v23 = vld [vmem:[%s0 + $0x18] sm:$0xf]
  %v24 = vld [vmem:[%s0 + $0x1c] sm:$0xf]
  %v25 = vld [vmem:[%s0 + $0x20] sm:$0xf]
  %v26 = vld [vmem:[%s0 + $0x24] sm:$0xf]
  %v27 = vld [vmem:[%s0 + $0x28] sm:$0xf]
  %v28 = vld [vmem:[%s0 + $0x2c] sm:$0xf]
  %v29 = vld [vmem:[%s0 + $0x30] sm:$0x3]
  %31 = vset.pattern.permute.xlu0 0
  %32 = vperm.xlu0 %31, %v16
  %v33 = vpop.permute.xlu0 %32
  %v48 = vunpack.c.l.b16 %v17
  %v49 = vunpack.c.l.b16 %v18
  %v50 = vunpack.c.l.b16 %v19
  %v51 = vunpack.c.l.b16 %v20
  %v52 = vunpack.c.l.b16 %v21
  %v53 = vunpack.c.l.b16 %v22
  %v54 = vunpack.c.l.b16 %v23
  %v55 = vunpack.c.l.b16 %v24
  %v56 = vunpack.c.l.b16 %v25
  %v57 = vunpack.c.l.b16 %v26
  %v58 = vunpack.c.l.b16 %v27
  %v59 = vunpack.c.l.b16 %v28
  %v60 = vunpack.c.l.b16 %v29
  %v61 = vpack.c.b16 %v49, %v48
  %v62 = vpack.c.b16 %v51, %v50
  %v63 = vpack.c.b16 %v53, %v52
  %v64 = vpack.c.b16 %v55, %v54
  %v65 = vpack.c.b16 %v57, %v56
  %v66 = vpack.c.b16 %v59, %v58
  %v67 = vpack.c.b16 %v60, %v60
  %vm74 = vcmask 818176
  %v76 = vsel %vm74, %v15, 0
  %vm78 = vcmask 1041408
  %v80 = vsel %vm78, %v67, 0
  %82 = vmatpush.bf16.msra.mxu0 0
  %83 = vmatpush.bf16.msra.mxu0 %v80
  %84 = vmatpush.bf16.msra.mxu0 %v66
  %85 = vmatpush.bf16.msra.mxu0 %v65
  %86 = vmatpush.bf16.msra.mxu0 %v64
  %87 = vmatpush.bf16.msra.mxu0 %v63
  %88 = vmatpush.bf16.msra.mxu0 %v62
  %89 = vmatpush.bf16.msra.mxu0 %v61
  %90 = vmatmul.bf16.gmra.mxu0 %v76
  %v91 = vpop.f32.mrf.mxu0
  %v92 = vadd.f32 %v33, %v91
  %v93 = vpop.f32.mrf.mxu0
  %94 = vdwg.mxu0
  %v95 = vmul.f32 %v92, 0.5
  %v96 = vadd.f32 %v95, 0.0
  %vm97 = vcmp.ge.f32.partialorder %v96, 1.0
  %v98 = vsel %vm97, 1, 0
  %v99 = vcvt.s32.f32 %v98
  %v100 = vsub.f32 1.0, %v99
  %v101 = vmul.f32 %v96, %v100
  %s102 = scalar_lea.vmem %s0, 52
  %v103 = vld [vmem:[%s102] sm:$0xf]
  %v104 = vld [vmem:[%s102 + $0x4] sm:$0xf]
  %v105 = vld [vmem:[%s102 + $0x8] sm:$0xf]
  %v106 = vld [vmem:[%s102 + $0xc] sm:$0xf]
  %v107 = vld [vmem:[%s102 + $0x10] sm:$0xf]
  %v108 = vld [vmem:[%s102 + $0x14] sm:$0xf]
  %v109 = vld [vmem:[%s102 + $0x18] sm:$0xf]
  %v110 = vld [vmem:[%s102 + $0x1c] sm:$0xf]
  %v111 = vld [vmem:[%s102 + $0x20] sm:$0xf]
  %v112 = vld [vmem:[%s102 + $0x24] sm:$0xf]
  %v113 = vld [vmem:[%s102 + $0x28] sm:$0xf]
  %v114 = vld [vmem:[%s102 + $0x2c] sm:$0xf]
  %v115 = vld [vmem:[%s102 + $0x30] sm:$0x3]
  %v129 = vunpack.c.l.b16 %v103
  %v130 = vunpack.c.l.b16 %v104
  %v131 = vunpack.c.l.b16 %v105
  %v132 = vunpack.c.l.b16 %v106
  %v133 = vunpack.c.l.b16 %v107
  %v134 = vunpack.c.l.b16 %v108
  %v135 = vunpack.c.l.b16 %v109
  %v136 = vunpack.c.l.b16 %v110
  %v137 = vunpack.c.l.b16 %v111
  %v138 = vunpack.c.l.b16 %v112
  %v139 = vunpack.c.l.b16 %v113
  %v140 = vunpack.c.l.b16 %v114
  %v141 = vunpack.c.l.b16 %v115
  %v142 = vpack.c.b16 %v130, %v129
  %v143 = vpack.c.b16 %v132, %v131
  %v144 = vpack.c.b16 %v134, %v133
  %v145 = vpack.c.b16 %v136, %v135
  %v146 = vpack.c.b16 %v138, %v137
  %v147 = vpack.c.b16 %v140, %v139
  %v148 = vpack.c.b16 %v141, %v141
  %v156 = vsel %vm78, %v148, 0
  %158 = vmatpush.bf16.msra.mxu0 0
  %159 = vmatpush.bf16.msra.mxu0 %v156
  %160 = vmatpush.bf16.msra.mxu0 %v147
  %161 = vmatpush.bf16.msra.mxu0 %v146
  %162 = vmatpush.bf16.msra.mxu0 %v145
  %163 = vmatpush.bf16.msra.mxu0 %v144
  %164 = vmatpush.bf16.msra.mxu0 %v143
  %165 = vmatpush.bf16.msra.mxu0 %v142
  %166 = vmatmul.bf16.gmra.mxu0 %v76
  %v167 = vpop.f32.mrf.mxu0
  %v168 = vadd.f32 %v33, %v167
  %v169 = vpop.f32.mrf.mxu0
  %170 = vdwg.mxu0
  %v171 = vsub.f32 %v168, %v101
  %v172 = vmul.f32 %v171, 0.5
  %v173 = vadd.f32 %v101, %v172
  %vm174 = vcmp.ge.f32.partialorder %v173, 1.0
  %v175 = vsel %vm174, 1, 0
  %v176 = vcvt.s32.f32 %v175
  %v177 = vsub.f32 1.0, %v176
  %v178 = vmul.f32 %v173, %v177
  %s179 = scalar_lea.vmem %s0, 104
  %v180 = vld [vmem:[%s179] sm:$0xf]
  %v181 = vld [vmem:[%s179 + $0x4] sm:$0xf]
  %v182 = vld [vmem:[%s179 + $0x8] sm:$0xf]
  %v183 = vld [vmem:[%s179 + $0xc] sm:$0xf]
  %v184 = vld [vmem:[%s179 + $0x10] sm:$0xf]
  %v185 = vld [vmem:[%s179 + $0x14] sm:$0xf]
  %v186 = vld [vmem:[%s179 + $0x18] sm:$0xf]
  %v187 = vld [vmem:[%s179 + $0x1c] sm:$0xf]
  %v188 = vld [vmem:[%s179 + $0x20] sm:$0xf]
  %v189 = vld [vmem:[%s179 + $0x24] sm:$0xf]
  %v190 = vld [vmem:[%s179 + $0x28] sm:$0xf]
  %v191 = vld [vmem:[%s179 + $0x2c] sm:$0xf]
  %v192 = vld [vmem:[%s179 + $0x30] sm:$0x3]
  %v206 = vunpack.c.l.b16 %v180
  %v207 = vunpack.c.l.b16 %v181
  %v208 = vunpack.c.l.b16 %v182
  %v209 = vunpack.c.l.b16 %v183
  %v210 = vunpack.c.l.b16 %v184
  %v211 = vunpack.c.l.b16 %v185
  %v212 = vunpack.c.l.b16 %v186
  %v213 = vunpack.c.l.b16 %v187
  %v214 = vunpack.c.l.b16 %v188
  %v215 = vunpack.c.l.b16 %v189
  %v216 = vunpack.c.l.b16 %v190
  %v217 = vunpack.c.l.b16 %v191
  %v218 = vunpack.c.l.b16 %v192
  %v219 = vpack.c.b16 %v207, %v206
  %v220 = vpack.c.b16 %v209, %v208
  %v221 = vpack.c.b16 %v211, %v210
  %v222 = vpack.c.b16 %v213, %v212
  %v223 = vpack.c.b16 %v215, %v214
  %v224 = vpack.c.b16 %v217, %v216
  %v225 = vpack.c.b16 %v218, %v218
  %v233 = vsel %vm78, %v225, 0
  %235 = vmatpush.bf16.msra.mxu0 0
  %236 = vmatpush.bf16.msra.mxu0 %v233
  %237 = vmatpush.bf16.msra.mxu0 %v224
  %238 = vmatpush.bf16.msra.mxu0 %v223
  %239 = vmatpush.bf16.msra.mxu0 %v222
  %240 = vmatpush.bf16.msra.mxu0 %v221
  %241 = vmatpush.bf16.msra.mxu0 %v220
  %242 = vmatpush.bf16.msra.mxu0 %v219
  %243 = vmatmul.bf16.gmra.mxu0 %v76
  %v244 = vpop.f32.mrf.mxu0
  %v245 = vadd.f32 %v33, %v244
  %v246 = vpop.f32.mrf.mxu0
  %247 = vdwg.mxu0
  %v248 = vsub.f32 %v245, %v178
  %v249 = vmul.f32 %v248, 0.5
  %v250 = vadd.f32 %v178, %v249
  %vm251 = vcmp.ge.f32.partialorder %v250, 1.0
  %v252 = vsel %vm251, 1, 0
  %v253 = vcvt.s32.f32 %v252
  %v254 = vsub.f32 1.0, %v253
  %v255 = vmul.f32 %v250, %v254
  %s256 = scalar_lea.vmem %s0, 156
  %v257 = vld [vmem:[%s256] sm:$0xf]
  %v258 = vld [vmem:[%s256 + $0x4] sm:$0xf]
  %v259 = vld [vmem:[%s256 + $0x8] sm:$0xf]
  %v260 = vld [vmem:[%s256 + $0xc] sm:$0xf]
  %v261 = vld [vmem:[%s256 + $0x10] sm:$0xf]
  %v262 = vld [vmem:[%s256 + $0x14] sm:$0xf]
  %v263 = vld [vmem:[%s256 + $0x18] sm:$0xf]
  %v264 = vld [vmem:[%s256 + $0x1c] sm:$0xf]
  %v265 = vld [vmem:[%s256 + $0x20] sm:$0xf]
  %v266 = vld [vmem:[%s256 + $0x24] sm:$0xf]
  %v267 = vld [vmem:[%s256 + $0x28] sm:$0xf]
  %v268 = vld [vmem:[%s256 + $0x2c] sm:$0xf]
  %v269 = vld [vmem:[%s256 + $0x30] sm:$0x3]
  %v283 = vunpack.c.l.b16 %v257
  %v284 = vunpack.c.l.b16 %v258
  %v285 = vunpack.c.l.b16 %v259
  %v286 = vunpack.c.l.b16 %v260
  %v287 = vunpack.c.l.b16 %v261
  %v288 = vunpack.c.l.b16 %v262
  %v289 = vunpack.c.l.b16 %v263
  %v290 = vunpack.c.l.b16 %v264
  %v291 = vunpack.c.l.b16 %v265
  %v292 = vunpack.c.l.b16 %v266
  %v293 = vunpack.c.l.b16 %v267
  %v294 = vunpack.c.l.b16 %v268
  %v295 = vunpack.c.l.b16 %v269
  %v296 = vpack.c.b16 %v284, %v283
  %v297 = vpack.c.b16 %v286, %v285
  %v298 = vpack.c.b16 %v288, %v287
  %v299 = vpack.c.b16 %v290, %v289
  %v300 = vpack.c.b16 %v292, %v291
  %v301 = vpack.c.b16 %v294, %v293
  %v302 = vpack.c.b16 %v295, %v295
  %v310 = vsel %vm78, %v302, 0
  %312 = vmatpush.bf16.msra.mxu0 0
  %313 = vmatpush.bf16.msra.mxu0 %v310
  %314 = vmatpush.bf16.msra.mxu0 %v301
  %315 = vmatpush.bf16.msra.mxu0 %v300
  %316 = vmatpush.bf16.msra.mxu0 %v299
  %317 = vmatpush.bf16.msra.mxu0 %v298
  %318 = vmatpush.bf16.msra.mxu0 %v297
  %319 = vmatpush.bf16.msra.mxu0 %v296
  %320 = vmatmul.bf16.gmra.mxu0 %v76
  %v321 = vpop.f32.mrf.mxu0
  %v322 = vadd.f32 %v33, %v321
  %v323 = vpop.f32.mrf.mxu0
  %324 = vdwg.mxu0
  %v325 = vsub.f32 %v322, %v255
  %v326 = vmul.f32 %v325, 0.5
  %v327 = vadd.f32 %v255, %v326
  %vm328 = vcmp.ge.f32.partialorder %v327, 1.0
  %v329 = vsel %vm328, 1, 0
  %v330 = vcvt.s32.f32 %v329
  %v331 = vpack.c.bf16 %v99, %v99
  %v332 = vpack.c.bf16 %v176, %v176
  %v333 = vpack.c.bf16 %v253, %v253
  %v334 = vpack.c.bf16 %v330, %v330
  %335 = vst [vmem:[%s3] sm:$0xf] %v331
  %336 = vst [vmem:[%s3 + $0x4] sm:$0xf] %v332
  %337 = vst [vmem:[%s3 + $0x8] sm:$0xf] %v333
  %338 = vst [vmem:[%s3 + $0xc] sm:$0xf] %v334
  // Predicated region
  $region14: #{axon_sddtp_csnn_forward.4} parent=0 // pred_check
    _
  $region15: #{axon_sddtp_csnn_forward.4} parent=0 // pred_check_branch
    %340 = sbr.rel (0) target = $region17
  $region16: #{axon_sddtp_csnn_forward.4} parent=0 // pred_region
    _
  $region17: #{axon_sddtp_csnn_forward.4} parent=0 // pred_fallthru
    _
  // Predicated region
  $region18: #{axon_sddtp_csnn_forward.4} parent=0 // pred_check
    _
  $region19: #{axon_sddtp_csnn_forward.4} parent=0 // pred_check_branch
    %342 = sbr.rel (0) target = $region21
  $region20: #{axon_sddtp_csnn_forward.4} parent=0 // pred_region
    _
  $region21: #{axon_sddtp_csnn_forward.4} parent=0 // pred_fallthru
    _

// kernel: axon_sddtp_csnn_forward.5
$region0: #{axon_sddtp_csnn_forward.5}
  #allocation0 [shape = 'u32[]', space=smem, size = 0x4, offset = 0x4, fixed_abs, tag = 'smem constant byte address 0x4 - core index']
  #allocation1 [shape = 'u32[72,128]{1,0:T(1,128)}', space=vmem, size = 0x9000, scoped, tag = 'internal scratch']
  %s0 = inlined_call_operand.vmem [shape: bf16[4,128,2], index: 0, kind: input, shape index: {}]
  %s1 = inlined_call_operand.vmem [shape: bf16[10,128], index: 1, kind: input, shape index: {}]
  %s2 = inlined_call_operand.vmem [shape: f32[10,1], index: 2, kind: input, shape index: {}]
  %s3 = inlined_call_operand.vmem [shape: f32[10,2], index: 3, kind: output, shape index: {}]
  %s4 = sld [smem:[#allocation0]]
  $region22: #{axon_sddtp_csnn_forward.5} parent=0
    _
  %s6 = ssub.s32 1, %s4
  %s7 = scalar_select 0, %s6, %s4
  // Predicated region
  $region2: #{axon_sddtp_csnn_forward.5} parent=0 // pred_check
    _
  $region3: #{axon_sddtp_csnn_forward.5} parent=0 // pred_check_branch
    %9 = sbr.rel (0) target = $region5
  $region4: #{axon_sddtp_csnn_forward.5} parent=0 // pred_region
    _
  $region5: #{axon_sddtp_csnn_forward.5} parent=0 // pred_fallthru
    _
  // Predicated region
  $region6: #{axon_sddtp_csnn_forward.5} parent=0 // pred_check
    _
  $region7: #{axon_sddtp_csnn_forward.5} parent=0 // pred_check_branch
    %11 = sbr.rel (0) target = $region9
  $region8: #{axon_sddtp_csnn_forward.5} parent=0 // pred_region
    _
  $region9: #{axon_sddtp_csnn_forward.5} parent=0 // pred_fallthru
    _
  // Predicated region
  $region10: #{axon_sddtp_csnn_forward.5} parent=0 // pred_check
    _
  $region11: #{axon_sddtp_csnn_forward.5} parent=0 // pred_check_branch
    %13 = sbr.rel (0) target = $region13
  $region12: #{axon_sddtp_csnn_forward.5} parent=0 // pred_region
    _
  $region13: #{axon_sddtp_csnn_forward.5} parent=0 // pred_fallthru
    _
  %v14 = vld [vmem:[%s1] sm:$0xf]
  %v15 = vld [vmem:[%s1 + $0x4] sm:$0x1]
  %v16 = vld [vmem:[%s2] sm:$0xff]
  %v17 = vld [vmem:[%s2 + $0x8] sm:$0x3]
  %v18 = vld [vmem:[%s0] sm:$0xf]
  %v19 = vld [vmem:[%s0 + $0x4] sm:$0xf]
  %v20 = vld [vmem:[%s0 + $0x8] sm:$0xf]
  %v21 = vld [vmem:[%s0 + $0xc] sm:$0xf]
  %v22 = vld [vmem:[%s0 + $0x10] sm:$0xf]
  %v23 = vld [vmem:[%s0 + $0x14] sm:$0xf]
  %v24 = vld [vmem:[%s0 + $0x18] sm:$0xf]
  %v25 = vld [vmem:[%s0 + $0x1c] sm:$0xf]
  %v26 = vld [vmem:[%s0 + $0x20] sm:$0xf]
  %v27 = vld [vmem:[%s0 + $0x24] sm:$0xf]
  %v28 = vld [vmem:[%s0 + $0x28] sm:$0xf]
  %v29 = vld [vmem:[%s0 + $0x2c] sm:$0xf]
  %v30 = vld [vmem:[%s0 + $0x30] sm:$0xf]
  %v31 = vld [vmem:[%s0 + $0x34] sm:$0xf]
  %v32 = vld [vmem:[%s0 + $0x38] sm:$0xf]
  %v33 = vld [vmem:[%s0 + $0x3c] sm:$0xf]
  %35 = vset.pattern.permute.xlu0 0
  %36 = vperm.xlu0 %35, %v16
  %v37 = vpop.permute.xlu0 %36
  %40 = vset.pattern.permute.xlu0 0
  %41 = vperm.xlu0 %40, %v17
  %v42 = vpop.permute.xlu0 %41
  %v46 = vunpack.c.l.b16 %v14
  %v47 = vunpack.c.l.b16 %v15
  %v48 = vpack.c.b16 %v47, %v46
  %v66 = vunpack.c.l.b16 %v18
  %v67 = vunpack.c.l.b16 %v19
  %v68 = vunpack.c.l.b16 %v20
  %v69 = vunpack.c.l.b16 %v21
  %v70 = vunpack.c.l.b16 %v22
  %v71 = vunpack.c.l.b16 %v23
  %v72 = vunpack.c.l.b16 %v24
  %v73 = vunpack.c.l.b16 %v25
  %v74 = vunpack.c.l.b16 %v26
  %v75 = vunpack.c.l.b16 %v27
  %v76 = vunpack.c.l.b16 %v28
  %v77 = vunpack.c.l.b16 %v29
  %v78 = vunpack.c.l.b16 %v30
  %v79 = vunpack.c.l.b16 %v31
  %v80 = vunpack.c.l.b16 %v32
  %v81 = vunpack.c.l.b16 %v33
  %v82 = vpack.c.b16 %v67, %v66
  %v83 = vpack.c.b16 %v69, %v68
  %v84 = vpack.c.b16 %v71, %v70
  %v85 = vpack.c.b16 %v73, %v72
  %v86 = vpack.c.b16 %v75, %v74
  %v87 = vpack.c.b16 %v77, %v76
  %v88 = vpack.c.b16 %v79, %v78
  %v89 = vpack.c.b16 %v81, %v80
  %98 = vmatpush.bf16.msra.mxu0 %v89
  %99 = vmatpush.bf16.msra.mxu0 %v88
  %100 = vmatpush.bf16.msra.mxu0 %v87
  %101 = vmatpush.bf16.msra.mxu0 %v86
  %102 = vmatpush.bf16.msra.mxu0 %v85
  %103 = vmatpush.bf16.msra.mxu0 %v84
  %104 = vmatpush.bf16.msra.mxu0 %v83
  %105 = vmatpush.bf16.msra.mxu0 %v82
  %106 = vmatmul.bf16.gmra.mxu0 %v48
  %v107 = vpop.f32.mrf.mxu0
  %v108 = vadd.f32 %v37, %v107
  %v109 = vpop.f32.mrf.mxu0
  %v110 = vadd.f32 %v42, %v109
  %111 = vdwg.mxu0
  %v112 = vmul.f32 %v108, 0.5
  %v113 = vmul.f32 %v110, 0.5
  %v114 = vadd.f32 %v112, 0.0
  %v115 = vadd.f32 %v113, 0.0
  %vm116 = vcmp.ge.f32.partialorder %v114, 1.0
  %vm117 = vcmp.ge.f32.partialorder %v115, 1.0
  %v118 = vsel %vm116, 1, 0
  %v119 = vsel %vm117, 1, 0
  %v120 = vcvt.s32.f32 %v118
  %v121 = vcvt.s32.f32 %v119
  %v122 = vadd.f32 %v120, 0.0
  %v123 = vadd.f32 %v121, 0.0
  %v124 = vsub.f32 1.0, %v120
  %v125 = vsub.f32 1.0, %v121
  %v126 = vmul.f32 %v114, %v124
  %v127 = vmul.f32 %v115, %v125
  %s128 = scalar_lea.vmem %s0, 64
  %v129 = vld [vmem:[%s128] sm:$0xf]
  %v130 = vld [vmem:[%s128 + $0x4] sm:$0xf]
  %v131 = vld [vmem:[%s128 + $0x8] sm:$0xf]
  %v132 = vld [vmem:[%s128 + $0xc] sm:$0xf]
  %v133 = vld [vmem:[%s128 + $0x10] sm:$0xf]
  %v134 = vld [vmem:[%s128 + $0x14] sm:$0xf]
  %v135 = vld [vmem:[%s128 + $0x18] sm:$0xf]
  %v136 = vld [vmem:[%s128 + $0x1c] sm:$0xf]
  %v137 = vld [vmem:[%s128 + $0x20] sm:$0xf]
  %v138 = vld [vmem:[%s128 + $0x24] sm:$0xf]
  %v139 = vld [vmem:[%s128 + $0x28] sm:$0xf]
  %v140 = vld [vmem:[%s128 + $0x2c] sm:$0xf]
  %v141 = vld [vmem:[%s128 + $0x30] sm:$0xf]
  %v142 = vld [vmem:[%s128 + $0x34] sm:$0xf]
  %v143 = vld [vmem:[%s128 + $0x38] sm:$0xf]
  %v144 = vld [vmem:[%s128 + $0x3c] sm:$0xf]
  %v161 = vunpack.c.l.b16 %v129
  %v162 = vunpack.c.l.b16 %v130
  %v163 = vunpack.c.l.b16 %v131
  %v164 = vunpack.c.l.b16 %v132
  %v165 = vunpack.c.l.b16 %v133
  %v166 = vunpack.c.l.b16 %v134
  %v167 = vunpack.c.l.b16 %v135
  %v168 = vunpack.c.l.b16 %v136
  %v169 = vunpack.c.l.b16 %v137
  %v170 = vunpack.c.l.b16 %v138
  %v171 = vunpack.c.l.b16 %v139
  %v172 = vunpack.c.l.b16 %v140
  %v173 = vunpack.c.l.b16 %v141
  %v174 = vunpack.c.l.b16 %v142
  %v175 = vunpack.c.l.b16 %v143
  %v176 = vunpack.c.l.b16 %v144
  %v177 = vpack.c.b16 %v162, %v161
  %v178 = vpack.c.b16 %v164, %v163
  %v179 = vpack.c.b16 %v166, %v165
  %v180 = vpack.c.b16 %v168, %v167
  %v181 = vpack.c.b16 %v170, %v169
  %v182 = vpack.c.b16 %v172, %v171
  %v183 = vpack.c.b16 %v174, %v173
  %v184 = vpack.c.b16 %v176, %v175
  %193 = vmatpush.bf16.msra.mxu0 %v184
  %194 = vmatpush.bf16.msra.mxu0 %v183
  %195 = vmatpush.bf16.msra.mxu0 %v182
  %196 = vmatpush.bf16.msra.mxu0 %v181
  %197 = vmatpush.bf16.msra.mxu0 %v180
  %198 = vmatpush.bf16.msra.mxu0 %v179
  %199 = vmatpush.bf16.msra.mxu0 %v178
  %200 = vmatpush.bf16.msra.mxu0 %v177
  %201 = vmatmul.bf16.gmra.mxu0 %v48
  %v202 = vpop.f32.mrf.mxu0
  %v203 = vadd.f32 %v37, %v202
  %v204 = vpop.f32.mrf.mxu0
  %v205 = vadd.f32 %v42, %v204
  %206 = vdwg.mxu0
  %v207 = vsub.f32 %v203, %v126
  %v208 = vsub.f32 %v205, %v127
  %v209 = vmul.f32 %v207, 0.5
  %v210 = vmul.f32 %v208, 0.5
  %v211 = vadd.f32 %v126, %v209
  %v212 = vadd.f32 %v127, %v210
  %vm213 = vcmp.ge.f32.partialorder %v211, 1.0
  %vm214 = vcmp.ge.f32.partialorder %v212, 1.0
  %v215 = vsel %vm213, 1, 0
  %v216 = vsel %vm214, 1, 0
  %v217 = vcvt.s32.f32 %v215
  %v218 = vcvt.s32.f32 %v216
  %v219 = vadd.f32 %v122, %v217
  %v220 = vadd.f32 %v123, %v218
  %v221 = vsub.f32 1.0, %v217
  %v222 = vsub.f32 1.0, %v218
  %v223 = vmul.f32 %v211, %v221
  %v224 = vmul.f32 %v212, %v222
  %s225 = scalar_lea.vmem %s0, 128
  %v226 = vld [vmem:[%s225] sm:$0xf]
  %v227 = vld [vmem:[%s225 + $0x4] sm:$0xf]
  %v228 = vld [vmem:[%s225 + $0x8] sm:$0xf]
  %v229 = vld [vmem:[%s225 + $0xc] sm:$0xf]
  %v230 = vld [vmem:[%s225 + $0x10] sm:$0xf]
  %v231 = vld [vmem:[%s225 + $0x14] sm:$0xf]
  %v232 = vld [vmem:[%s225 + $0x18] sm:$0xf]
  %v233 = vld [vmem:[%s225 + $0x1c] sm:$0xf]
  %v234 = vld [vmem:[%s225 + $0x20] sm:$0xf]
  %v235 = vld [vmem:[%s225 + $0x24] sm:$0xf]
  %v236 = vld [vmem:[%s225 + $0x28] sm:$0xf]
  %v237 = vld [vmem:[%s225 + $0x2c] sm:$0xf]
  %v238 = vld [vmem:[%s225 + $0x30] sm:$0xf]
  %v239 = vld [vmem:[%s225 + $0x34] sm:$0xf]
  %v240 = vld [vmem:[%s225 + $0x38] sm:$0xf]
  %v241 = vld [vmem:[%s225 + $0x3c] sm:$0xf]
  %v258 = vunpack.c.l.b16 %v226
  %v259 = vunpack.c.l.b16 %v227
  %v260 = vunpack.c.l.b16 %v228
  %v261 = vunpack.c.l.b16 %v229
  %v262 = vunpack.c.l.b16 %v230
  %v263 = vunpack.c.l.b16 %v231
  %v264 = vunpack.c.l.b16 %v232
  %v265 = vunpack.c.l.b16 %v233
  %v266 = vunpack.c.l.b16 %v234
  %v267 = vunpack.c.l.b16 %v235
  %v268 = vunpack.c.l.b16 %v236
  %v269 = vunpack.c.l.b16 %v237
  %v270 = vunpack.c.l.b16 %v238
  %v271 = vunpack.c.l.b16 %v239
  %v272 = vunpack.c.l.b16 %v240
  %v273 = vunpack.c.l.b16 %v241
  %v274 = vpack.c.b16 %v259, %v258
  %v275 = vpack.c.b16 %v261, %v260
  %v276 = vpack.c.b16 %v263, %v262
  %v277 = vpack.c.b16 %v265, %v264
  %v278 = vpack.c.b16 %v267, %v266
  %v279 = vpack.c.b16 %v269, %v268
  %v280 = vpack.c.b16 %v271, %v270
  %v281 = vpack.c.b16 %v273, %v272
  %290 = vmatpush.bf16.msra.mxu0 %v281
  %291 = vmatpush.bf16.msra.mxu0 %v280
  %292 = vmatpush.bf16.msra.mxu0 %v279
  %293 = vmatpush.bf16.msra.mxu0 %v278
  %294 = vmatpush.bf16.msra.mxu0 %v277
  %295 = vmatpush.bf16.msra.mxu0 %v276
  %296 = vmatpush.bf16.msra.mxu0 %v275
  %297 = vmatpush.bf16.msra.mxu0 %v274
  %298 = vmatmul.bf16.gmra.mxu0 %v48
  %v299 = vpop.f32.mrf.mxu0
  %v300 = vadd.f32 %v37, %v299
  %v301 = vpop.f32.mrf.mxu0
  %v302 = vadd.f32 %v42, %v301
  %303 = vdwg.mxu0
  %v304 = vsub.f32 %v300, %v223
  %v305 = vsub.f32 %v302, %v224
  %v306 = vmul.f32 %v304, 0.5
  %v307 = vmul.f32 %v305, 0.5
  %v308 = vadd.f32 %v223, %v306
  %v309 = vadd.f32 %v224, %v307
  %vm310 = vcmp.ge.f32.partialorder %v308, 1.0
  %vm311 = vcmp.ge.f32.partialorder %v309, 1.0
  %v312 = vsel %vm310, 1, 0
  %v313 = vsel %vm311, 1, 0
  %v314 = vcvt.s32.f32 %v312
  %v315 = vcvt.s32.f32 %v313
  %v316 = vadd.f32 %v219, %v314
  %v317 = vadd.f32 %v220, %v315
  %v318 = vsub.f32 1.0, %v314
  %v319 = vsub.f32 1.0, %v315
  %v320 = vmul.f32 %v308, %v318
  %v321 = vmul.f32 %v309, %v319
  %s322 = scalar_lea.vmem %s0, 192
  %v323 = vld [vmem:[%s322] sm:$0xf]
  %v324 = vld [vmem:[%s322 + $0x4] sm:$0xf]
  %v325 = vld [vmem:[%s322 + $0x8] sm:$0xf]
  %v326 = vld [vmem:[%s322 + $0xc] sm:$0xf]
  %v327 = vld [vmem:[%s322 + $0x10] sm:$0xf]
  %v328 = vld [vmem:[%s322 + $0x14] sm:$0xf]
  %v329 = vld [vmem:[%s322 + $0x18] sm:$0xf]
  %v330 = vld [vmem:[%s322 + $0x1c] sm:$0xf]
  %v331 = vld [vmem:[%s322 + $0x20] sm:$0xf]
  %v332 = vld [vmem:[%s322 + $0x24] sm:$0xf]
  %v333 = vld [vmem:[%s322 + $0x28] sm:$0xf]
  %v334 = vld [vmem:[%s322 + $0x2c] sm:$0xf]
  %v335 = vld [vmem:[%s322 + $0x30] sm:$0xf]
  %v336 = vld [vmem:[%s322 + $0x34] sm:$0xf]
  %v337 = vld [vmem:[%s322 + $0x38] sm:$0xf]
  %v338 = vld [vmem:[%s322 + $0x3c] sm:$0xf]
  %v355 = vunpack.c.l.b16 %v323
  %v356 = vunpack.c.l.b16 %v324
  %v357 = vunpack.c.l.b16 %v325
  %v358 = vunpack.c.l.b16 %v326
  %v359 = vunpack.c.l.b16 %v327
  %v360 = vunpack.c.l.b16 %v328
  %v361 = vunpack.c.l.b16 %v329
  %v362 = vunpack.c.l.b16 %v330
  %v363 = vunpack.c.l.b16 %v331
  %v364 = vunpack.c.l.b16 %v332
  %v365 = vunpack.c.l.b16 %v333
  %v366 = vunpack.c.l.b16 %v334
  %v367 = vunpack.c.l.b16 %v335
  %v368 = vunpack.c.l.b16 %v336
  %v369 = vunpack.c.l.b16 %v337
  %v370 = vunpack.c.l.b16 %v338
  %v371 = vpack.c.b16 %v356, %v355
  %v372 = vpack.c.b16 %v358, %v357
  %v373 = vpack.c.b16 %v360, %v359
  %v374 = vpack.c.b16 %v362, %v361
  %v375 = vpack.c.b16 %v364, %v363
  %v376 = vpack.c.b16 %v366, %v365
  %v377 = vpack.c.b16 %v368, %v367
  %v378 = vpack.c.b16 %v370, %v369
  %387 = vmatpush.bf16.msra.mxu0 %v378
  %388 = vmatpush.bf16.msra.mxu0 %v377
  %389 = vmatpush.bf16.msra.mxu0 %v376
  %390 = vmatpush.bf16.msra.mxu0 %v375
  %391 = vmatpush.bf16.msra.mxu0 %v374
  %392 = vmatpush.bf16.msra.mxu0 %v373
  %393 = vmatpush.bf16.msra.mxu0 %v372
  %394 = vmatpush.bf16.msra.mxu0 %v371
  %395 = vmatmul.bf16.gmra.mxu0 %v48
  %v396 = vpop.f32.mrf.mxu0
  %v397 = vadd.f32 %v37, %v396
  %v398 = vpop.f32.mrf.mxu0
  %v399 = vadd.f32 %v42, %v398
  %400 = vdwg.mxu0
  %v401 = vsub.f32 %v397, %v320
  %v402 = vsub.f32 %v399, %v321
  %v403 = vmul.f32 %v401, 0.5
  %v404 = vmul.f32 %v402, 0.5
  %v405 = vadd.f32 %v320, %v403
  %v406 = vadd.f32 %v321, %v404
  %vm407 = vcmp.ge.f32.partialorder %v405, 1.0
  %vm408 = vcmp.ge.f32.partialorder %v406, 1.0
  %v409 = vsel %vm407, 1, 0
  %v410 = vsel %vm408, 1, 0
  %v411 = vcvt.s32.f32 %v409
  %v412 = vcvt.s32.f32 %v410
  %v413 = vadd.f32 %v316, %v411
  %v414 = vadd.f32 %v317, %v412
  %v415 = vmul.f32 %v413, 0.25
  %v416 = vmul.f32 %v414, 0.25
  %vm417 = vcmask 15360
  %418 = vst.msk [vmem:[%s3] sm:$0xff] %vm417, %v415
  %vm419 = vcmask 9216
  %420 = vst.msk [vmem:[%s3 + $0x8] sm:$0x3] %vm419, %v416
  // Predicated region
  $region14: #{axon_sddtp_csnn_forward.5} parent=0 // pred_check
    _
  $region15: #{axon_sddtp_csnn_forward.5} parent=0 // pred_check_branch
    %422 = sbr.rel (0) target = $region17
  $region16: #{axon_sddtp_csnn_forward.5} parent=0 // pred_region
    _
  $region17: #{axon_sddtp_csnn_forward.5} parent=0 // pred_fallthru
    _
  // Predicated region
  $region18: #{axon_sddtp_csnn_forward.5} parent=0 // pred_check
    _
  $region19: #{axon_sddtp_csnn_forward.5} parent=0 // pred_check_branch
    %424 = sbr.rel (0) target = $region21
  $region20: #{axon_sddtp_csnn_forward.5} parent=0 // pred_region
    _
  $region21: #{axon_sddtp_csnn_forward.5} parent=0 // pred_fallthru
    _

</llo_original>
